<compile_context>
chip_gen: v7x
topology: tpu7x:2x2x1
jax: 0.10.0
libtpu: 0.0.40
codegen_flags: <defaults>
</compile_context>

<pallas_src>
import jax
import jax.numpy as jnp
from jax.experimental import pallas as pl
from jax.experimental.pallas import tpu as pltpu


# ----------------------------------------------------------------------------
# small helpers
# ----------------------------------------------------------------------------
def _round_up(v, m):
    return ((v + m - 1) // m) * m


def _pad2(w, rows, cols):
    w = jnp.asarray(w, jnp.float32)
    out = jnp.zeros((rows, cols), jnp.float32)
    return out.at[: w.shape[0], : w.shape[1]].set(w)


def _nbytes(shape, dtype):
    size = 1
    for d in shape:
        size *= int(d)
    return size * jnp.dtype(dtype).itemsize


# ----------------------------------------------------------------------------
# Fused kernel: L x (aggregate + conv-MLP) + jk-cat projection + add-pool + head
# ----------------------------------------------------------------------------
def _gin_fused_kernel(a_ref, x_ref, w1_ref, b1_ref, w2_ref, b2_ref, wjk_ref,
                      pool_ref, embb_ref, wm1_ref, bm1_ref, wm2_ref, bm2_ref,
                      out_ref, h_ref, acc_ref, emb_ref):
    l, i, k = pl.program_id(0), pl.program_id(1), pl.program_id(2)
    nl, ni, nk = pl.num_programs(0), pl.num_programs(1), pl.num_programs(2)
    tm, tk = a_ref.shape  # (dst tile, src tile)

    # --- whole-grid init: seed the layer-input buffer with x, zero pooled acc.
    @pl.when((l == 0) & (i == 0) & (k == 0))
    def _():
        h_ref[0, :, :] = x_ref[...]
        emb_ref[...] = jnp.zeros_like(emb_ref)

    # --- per (layer, dst-tile) init of the aggregation accumulator.
    @pl.when(k == 0)
    def _():
        acc_ref[...] = jnp.zeros_like(acc_ref)

    koff = pl.multiple_of(k * tk, tk)
    ioff = pl.multiple_of(i * tm, tm)

    # --- A[dst_tile, src_tile] @ h[src_tile]   (bf16 MXU, f32 accumulate)
    acc_ref[...] += jnp.dot(a_ref[...], h_ref[0, pl.ds(koff, tk), :],
                            preferred_element_type=jnp.float32)

    # --- last src tile: GIN conv-MLP epilogue + fused jk projection / pooling.
    @pl.when(k == nk - 1)
    def _():
        x_dst = h_ref[0, pl.ds(ioff, tm), :].astype(jnp.float32)
        z = x_dst + acc_ref[...]                              # (1+eps)*x + sum_nbrs, eps=0
        t = jnp.dot(z.astype(jnp.bfloat16), w1_ref[0],
                    preferred_element_type=jnp.float32) + b1_ref[0]
        t = jnp.maximum(t, 0.0)                               # conv-MLP internal ReLU
        t = jnp.dot(t.astype(jnp.bfloat16), w2_ref[0],
                    preferred_element_type=jnp.float32) + b2_ref[0]
        h_new = jnp.maximum(t, 0.0).astype(jnp.bfloat16)      # BasicGNN act after conv
        h_ref[1, pl.ds(ioff, tm), :] = h_new                  # next layer's input (pong)
        # jk='cat' projection + global_add_pool, accumulated per (layer, tile):
        #   emb += P[:, tile] @ (h_l[tile] @ Wjk_l)
        xo = jnp.dot(h_new, wjk_ref[0], preferred_element_type=jnp.float32)
        emb_ref[...] += jnp.dot(pool_ref[...], xo.astype(jnp.bfloat16),
                                preferred_element_type=jnp.float32)

    # --- end of a non-final layer: promote pong buffer to next layer's input.
    @pl.when((k == nk - 1) & (i == ni - 1) & (l < nl - 1))
    def _():
        h_ref[0, :, :] = h_ref[1, :, :]

    # --- very last grid step: MLP head (eval BatchNorm pre-folded into wm1/bm1).
    @pl.when((l == nl - 1) & (i == ni - 1) & (k == nk - 1))
    def _():
        emb = emb_ref[...] + embb_ref[...]                    # + pooled jk bias (counts*bjk)
        y = jnp.dot(emb.astype(jnp.bfloat16), wm1_ref[...],
                    preferred_element_type=jnp.float32) + bm1_ref[...]
        y = jnp.maximum(y, 0.0)
        out_ref[...] = jnp.dot(y.astype(jnp.bfloat16), wm2_ref[...],
                               preferred_element_type=jnp.float32) + bm2_ref[...]


# ----------------------------------------------------------------------------
# Wrapper: pad/stack params, build grid, call the fused kernel
# ----------------------------------------------------------------------------
def gin_forward(x, a, pool_mat, params, *, tile=128):
    """Fused GIN forward pass. Returns [num_graphs, out_dim] float32."""
    f32, bf16 = jnp.float32, jnp.bfloat16

    n, f = x.shape
    g = pool_mat.shape[0]
    layers = params["layers"]
    num_layers = len(layers)
    hidden = layers[0][2].shape[1]
    out_dim = params["wm2"].shape[1]

    pw = _round_up(max(f, hidden), 128)      # shared padded feature width (x and h)
    op = _round_up(out_dim, 128)             # lane-dense head-output width
    npad = _round_up(n, tile)
    gp = _round_up(g, 8)
    ni = npad // tile
    nk = npad // tile

    # ---- pad / stack parameters (wrapper-side, constant-folded by XLA) ----
    w1s = jnp.stack([_pad2(w1, pw, pw) for (w1, _, _, _) in layers]).astype(bf16)
    b1s = jnp.stack([_pad2(b1, 1, pw) for (_, b1, _, _) in layers])
    w2s = jnp.stack([_pad2(w2, pw, pw) for (_, _, w2, _) in layers]).astype(bf16)
    b2s = jnp.stack([_pad2(b2, 1, pw) for (_, _, _, b2) in layers])
    wjks = jnp.stack([_pad2(params["wjk"][l * hidden:(l + 1) * hidden, :], pw, pw)
                      for l in range(num_layers)]).astype(bf16)

    # pooled jk bias:  P @ (1 * bjk) == node_counts[:, None] * bjk
    counts = pool_mat.sum(axis=1)
    embb = jnp.zeros((gp, pw), f32).at[:g, :hidden].set(
        counts[:, None] * params["bjk"].reshape(1, hidden))

    # fold eval-mode BatchNorm into the first head Linear
    scale = params["gamma"].reshape(1, hidden) / jnp.sqrt(
        params["rv"].reshape(1, hidden) + 1e-5)
    wm1f = params["wm1"] * scale
    bm1f = (params["bm1"].reshape(1, hidden) - params["rm"].reshape(1, hidden)) * scale \
        + params["beta"].reshape(1, hidden)
    wm1p = _pad2(wm1f, pw, pw).astype(bf16)
    bm1p = _pad2(bm1f, 1, pw)
    wm2p = _pad2(params["wm2"], pw, op).astype(bf16)
    bm2p = _pad2(params["bm2"].reshape(1, out_dim), 1, op)

    # ---- pad inputs (extra nodes/cols are zero: no effect on pooled output) ----
    x_p = _pad2(x, npad, pw).astype(bf16)
    a_p = _pad2(a, npad, npad).astype(bf16)
    p_p = _pad2(pool_mat, gp, npad).astype(bf16)

    grid = (num_layers, ni, nk)
    in_specs = [
        pl.BlockSpec((tile, tile), lambda l, i, k: (i, k)),       # A tile (dst, src)
        pl.BlockSpec((npad, pw), lambda l, i, k: (0, 0)),         # x  (seed, fetched once)
        pl.BlockSpec((1, pw, pw), lambda l, i, k: (l, 0, 0)),     # W1[l]
        pl.BlockSpec((1, 1, pw), lambda l, i, k: (l, 0, 0)),      # b1[l]
        pl.BlockSpec((1, pw, pw), lambda l, i, k: (l, 0, 0)),     # W2[l]
        pl.BlockSpec((1, 1, pw), lambda l, i, k: (l, 0, 0)),      # b2[l]
        pl.BlockSpec((1, pw, pw), lambda l, i, k: (l, 0, 0)),     # Wjk[l]
        pl.BlockSpec((gp, tile), lambda l, i, k: (0, i)),         # P[:, dst tile]
        pl.BlockSpec((gp, pw), lambda l, i, k: (0, 0)),           # pooled jk bias
        pl.BlockSpec((pw, pw), lambda l, i, k: (0, 0)),           # Wm1 (BN folded)
        pl.BlockSpec((1, pw), lambda l, i, k: (0, 0)),            # bm1 (BN folded)
        pl.BlockSpec((pw, op), lambda l, i, k: (0, 0)),           # Wm2
        pl.BlockSpec((1, op), lambda l, i, k: (0, 0)),            # bm2
    ]
    out_specs = pl.BlockSpec((gp, op), lambda l, i, k: (0, 0))
    scratch_shapes = [
        pltpu.VMEM((2, npad, pw), bf16),   # resident node activations (ping / pong)
        pltpu.VMEM((tile, pw), f32),       # A @ h accumulator for one dst tile
        pltpu.VMEM((gp, pw), f32),         # pooled jk accumulator
    ]

    # explicit scoped-VMEM budget with headroom (inputs are double-buffered)
    blk_bytes = [
        _nbytes((tile, tile), bf16), _nbytes((npad, pw), bf16),
        _nbytes((1, pw, pw), bf16), _nbytes((1, 1, pw), f32),
        _nbytes((1, pw, pw), bf16), _nbytes((1, 1, pw), f32),
        _nbytes((1, pw, pw), bf16),
        _nbytes((gp, tile), bf16), _nbytes((gp, pw), f32),
        _nbytes((pw, pw), bf16), _nbytes((1, pw), f32),
        _nbytes((pw, op), bf16), _nbytes((1, op), f32),
        _nbytes((gp, op), f32),
    ]
    scratch_bytes = (_nbytes((2, npad, pw), bf16) + _nbytes((tile, pw), f32)
                     + _nbytes((gp, pw), f32))
    est = 2 * sum(blk_bytes) + scratch_bytes
    vmem_limit = int(min(max(4 * est, 32 * 2 ** 20), 64 * 2 ** 20))

    out = pl.pallas_call(
        _gin_fused_kernel,
        out_shape=jax.ShapeDtypeStruct((gp, op), f32),
        grid_spec=pltpu.PrefetchScalarGridSpec(
            num_scalar_prefetch=0,
            grid=grid,
            in_specs=in_specs,
            out_specs=out_specs,
            scratch_shapes=scratch_shapes),
        compiler_params=pltpu.CompilerParams(
            # Every axis carries state through VMEM scratch (resident h, pooled
            # accumulator), so none can be sharded across cores -> "arbitrary".
            dimension_semantics=("arbitrary", "arbitrary", "arbitrary"),
            vmem_limit_bytes=vmem_limit),
    )(a_p, x_p, w1s, b1s, w2s, b2s, wjks, p_p, embb, wm1p, bm1p, wm2p, bm2p)

    return out[:g, :out_dim]


# ----------------------------------------------------------------------------
# References
# ----------------------------------------------------------------------------
def gin_reference_f32(x, a, pool_mat, params):
    """Pure-f32 reference implementing the original module (spec)."""
    xs = []
    h = x
    for (w1, b1, w2, b2) in params["layers"]:
        z = h + a @ h
        t = jnp.maximum(z @ w1 + b1, 0.0)
        t = t @ w2 + b2
        h = jnp.maximum(t, 0.0)
        xs.append(h)
    xcat = jnp.concatenate(xs, axis=-1)
    xo = xcat @ params["wjk"] + params["bjk"]
    emb = pool_mat @ xo
    y = emb @ params["wm1"] + params["bm1"]
    y = (y - params["rm"]) / jnp.sqrt(params["rv"] + 1e-5) * params["gamma"] + params["beta"]
    y = jnp.maximum(y, 0.0)
    return y @ params["wm2"] + params["bm2"]


def gin_reference_bf16(x, a, pool_mat, params):
    """Reference mirroring the kernel's bf16-operand / f32-accumulate matmuls."""
    def mm(u, v):
        return jnp.dot(u.astype(jnp.bfloat16), v.astype(jnp.bfloat16),
                       preferred_element_type=jnp.float32)

    def rb(u):  # round-trip through bf16 (matches bf16 storage in the kernel)
        return u.astype(jnp.bfloat16).astype(jnp.float32)

    hidden = params["layers"][0][2].shape[1]
    h = rb(x)
    emb = jnp.zeros((pool_mat.shape[0], hidden), jnp.float32)
    for li, (w1, b1, w2, b2) in enumerate(params["layers"]):
        z = h + mm(a, h)
        t = jnp.maximum(mm(z, w1) + b1, 0.0)
        t = mm(t, w2) + b2
        h = rb(jnp.maximum(t, 0.0))
        wjk_l = params["wjk"][li * hidden:(li + 1) * hidden, :]
        emb = emb + mm(pool_mat, mm(h, wjk_l))
    emb = emb + pool_mat.sum(axis=1, keepdims=True) * params["bjk"]
    scale = params["gamma"] / jnp.sqrt(params["rv"] + 1e-5)
    wm1f = params["wm1"] * scale
    bm1f = (params["bm1"] - params["rm"]) * scale + params["beta"]
    y = jnp.maximum(mm(emb, wm1f) + bm1f, 0.0)
    return mm(y, params["wm2"]) + params["bm2"]


# ----------------------------------------------------------------------------
# Deterministic parameter construction
# ----------------------------------------------------------------------------
def make_params(key, input_dim, hidden_dim, out_dim, num_layers):
    keys = iter(jax.random.split(key, 4 * num_layers + 8))

    def lin(k, fan_in, fan_out):
        return jax.random.normal(k, (fan_in, fan_out), jnp.float32) * (1.0 / jnp.sqrt(fan_in))

    layers = []
    in_c = input_dim
    for _ in range(num_layers):
        w1 = lin(next(keys), in_c, hidden_dim)
        b1 = jax.random.normal(next(keys), (1, hidden_dim), jnp.float32) * 0.01
        w2 = lin(next(keys), hidden_dim, hidden_dim)
        b2 = jax.random.normal(next(keys), (1, hidden_dim), jnp.float32) * 0.01
        layers.append((w1, b1, w2, b2))
        in_c = hidden_dim

    return {
        "layers": layers,
        "wjk": lin(next(keys), num_layers * hidden_dim, hidden_dim),
        "bjk": jax.random.normal(next(keys), (1, hidden_dim), jnp.float32) * 0.01,
        "wm1": lin(next(keys), hidden_dim, hidden_dim),
        "bm1": jax.random.normal(next(keys), (1, hidden_dim), jnp.float32) * 0.01,
        # BatchNorm1d eval-mode params (default init: gamma=1, beta=0, rm=0, rv=1)
        "gamma": jnp.ones((1, hidden_dim), jnp.float32),
        "beta": jnp.zeros((1, hidden_dim), jnp.float32),
        "rm": jnp.zeros((1, hidden_dim), jnp.float32),
        "rv": jnp.ones((1, hidden_dim), jnp.float32),
        "wm2": lin(next(keys), hidden_dim, out_dim),
        "bm2": jax.random.normal(next(keys), (1, out_dim), jnp.float32) * 0.01,
    }


if __name__ == "__main__":
    # Small synthetic batch: 2 ring graphs of 80 nodes each (N=160 -> padded to
    # 256 nodes -> a 2x2 node-tile grid per layer, exercising the tiled path).
    NODES_PER_GRAPH, NUM_GRAPHS = 80, 2
    N = NODES_PER_GRAPH * NUM_GRAPHS
    INPUT_DIM, HIDDEN_DIM, OUT_DIM, NUM_LAYERS = 8, 32, 4, 3

    key = jax.random.PRNGKey(0)
    k_x, k_p = jax.random.split(key, 2)
    x = jax.random.normal(k_x, (N, INPUT_DIM), jnp.float32)

    # edge_index: bidirectional ring inside each graph
    src_list, dst_list = [], []
    for gi in range(NUM_GRAPHS):
        base = gi * NODES_PER_GRAPH
        for ii in range(NODES_PER_GRAPH):
            u, v = base + ii, base + (ii + 1) % NODES_PER_GRAPH
            src_list += [u, v]
            dst_list += [v, u]
    src = jnp.array(src_list, jnp.int32)
    dst = jnp.array(dst_list, jnp.int32)
    adj = jnp.zeros((N, N), jnp.float32).at[dst, src].add(1.0)   # A[dst, src]

    batch = jnp.repeat(jnp.arange(NUM_GRAPHS, dtype=jnp.int32), NODES_PER_GRAPH)
    pool = (batch[None, :] == jnp.arange(NUM_GRAPHS)[:, None]).astype(jnp.float32)

    params = make_params(k_p, INPUT_DIM, HIDDEN_DIM, OUT_DIM, NUM_LAYERS)

    out = jax.block_until_ready(gin_forward(x, adj, pool, params))
    assert out.shape == (NUM_GRAPHS, OUT_DIM)

    # precision-matched check (reference mirrors the kernel's bf16/f32 matmuls)
    ref_b = gin_reference_bf16(x, adj, pool, params)
    assert jnp.allclose(out, ref_b, rtol=1e-2, atol=1e-2), (out, ref_b)

    # loose sanity check against the pure-f32 spec reference
    ref_f = gin_reference_f32(x, adj, pool, params)
    err = float(jnp.max(jnp.abs(out - ref_f)))
    assert err <= 0.05 * float(jnp.max(jnp.abs(ref_f))) + 0.25, (err, out, ref_f)

    print("KERNEL_OK")
</pallas_src>

<mosaic_0001>
module attributes {stable_mosaic.version = 11 : i64} {
  func.func @_gin_fused_kernel(%arg0: i32, %arg1: i32, %arg2: i32, %arg3: memref<128x128xbf16, #tpu.memory_space<vmem>>, %arg4: memref<256x128xbf16, #tpu.memory_space<vmem>>, %arg5: memref<1x128x128xbf16, #tpu.memory_space<vmem>>, %arg6: memref<1x1x128xf32, #tpu.memory_space<vmem>>, %arg7: memref<1x128x128xbf16, #tpu.memory_space<vmem>>, %arg8: memref<1x1x128xf32, #tpu.memory_space<vmem>>, %arg9: memref<1x128x128xbf16, #tpu.memory_space<vmem>>, %arg10: memref<8x128xbf16, #tpu.memory_space<vmem>>, %arg11: memref<8x128xf32, #tpu.memory_space<vmem>>, %arg12: memref<128x128xbf16, #tpu.memory_space<vmem>>, %arg13: memref<1x128xf32, #tpu.memory_space<vmem>>, %arg14: memref<128x128xbf16, #tpu.memory_space<vmem>>, %arg15: memref<1x128xf32, #tpu.memory_space<vmem>>, %arg16: memref<8x128xf32, #tpu.memory_space<vmem>>, %arg17: memref<2x256x128xbf16, #tpu.memory_space<vmem>>, %arg18: memref<128x128xf32, #tpu.memory_space<vmem>>, %arg19: memref<8x128xf32, #tpu.memory_space<vmem>>) attributes {dimension_semantics = [#tpu.dimension_semantics<arbitrary>, #tpu.dimension_semantics<arbitrary>, #tpu.dimension_semantics<arbitrary>], iteration_bounds = array<i64: 3, 2, 2>, scalar_prefetch = 0 : i64, scratch_operands = 3 : i64, tpu.core_type = #tpu.core_type<tc>, window_params = [{transform_indices = @transform_0, window_bounds = array<i64: 128, 128>}, {pipeline_mode = #tpu.pipeline_mode<synchronous>, transform_indices = @transform_1, window_bounds = array<i64: 256, 128>}, {transform_indices = @transform_2, window_bounds = array<i64: 1, 128, 128>}, {transform_indices = @transform_3, window_bounds = array<i64: 1, 1, 128>}, {transform_indices = @transform_4, window_bounds = array<i64: 1, 128, 128>}, {transform_indices = @transform_5, window_bounds = array<i64: 1, 1, 128>}, {transform_indices = @transform_6, window_bounds = array<i64: 1, 128, 128>}, {transform_indices = @transform_7, window_bounds = array<i64: 8, 128>}, {pipeline_mode = #tpu.pipeline_mode<synchronous>, transform_indices = @transform_8, window_bounds = array<i64: 8, 128>}, {pipeline_mode = #tpu.pipeline_mode<synchronous>, transform_indices = @transform_9, window_bounds = array<i64: 128, 128>}, {pipeline_mode = #tpu.pipeline_mode<synchronous>, transform_indices = @transform_10, window_bounds = array<i64: 1, 128>}, {pipeline_mode = #tpu.pipeline_mode<synchronous>, transform_indices = @transform_11, window_bounds = array<i64: 128, 128>}, {pipeline_mode = #tpu.pipeline_mode<synchronous>, transform_indices = @transform_12, window_bounds = array<i64: 1, 128>}, {pipeline_mode = #tpu.pipeline_mode<synchronous>, transform_indices = @transform_13, window_bounds = array<i64: 8, 128>}]} {
    %c0_i32 = arith.constant 0 : i32
    %0 = arith.cmpi eq, %arg0, %c0_i32 : i32
    %c0_i32_0 = arith.constant 0 : i32
    %1 = arith.cmpi eq, %arg1, %c0_i32_0 : i32
    %2 = arith.andi %0, %1 : i1
    %c0_i32_1 = arith.constant 0 : i32
    %3 = arith.cmpi eq, %arg2, %c0_i32_1 : i32
    %4 = arith.andi %2, %3 : i1
    %5 = arith.extui %4 : i1 to i32
    %c0_i32_2 = arith.constant 0 : i32
    %6 = arith.cmpi ne, %5, %c0_i32_2 : i32
    scf.if %6 {
      %c0_21 = arith.constant 0 : index
      %c0_22 = arith.constant 0 : index
      %39 = vector.load %arg4[%c0_21, %c0_22] : memref<256x128xbf16, #tpu.memory_space<vmem>>, vector<256x128xbf16>
      %c0_23 = arith.constant 0 : index
      %c0_24 = arith.constant 0 : index
      %c0_25 = arith.constant 0 : index
      %40 = vector.load %arg17[%c0_23, %c0_24, %c0_25] : memref<2x256x128xbf16, #tpu.memory_space<vmem>>, vector<1x256x128xbf16>
      %41 = vector.shape_cast %40 : vector<1x256x128xbf16> to vector<256x128xbf16>
      %42 = vector.shape_cast %39 : vector<256x128xbf16> to vector<1x256x128xbf16>
      tpu.vector_store %arg17[%c0_23, %c0_24, %c0_25], %42 {strides = array<i32>} : memref<2x256x128xbf16, #tpu.memory_space<vmem>>, vector<1x256x128xbf16>,
      %cst_26 = arith.constant 0.000000e+00 : f32
      %43 = vector.broadcast %cst_26 : f32 to vector<8x128xf32>
      %c0_27 = arith.constant 0 : index
      %c0_28 = arith.constant 0 : index
      %44 = vector.load %arg19[%c0_27, %c0_28] : memref<8x128xf32, #tpu.memory_space<vmem>>, vector<8x128xf32>
      tpu.vector_store %arg19[%c0_27, %c0_28], %43 {strides = array<i32>} : memref<8x128xf32, #tpu.memory_space<vmem>>, vector<8x128xf32>,
    } else {
    }
    %c0_i32_3 = arith.constant 0 : i32
    %7 = arith.cmpi eq, %arg2, %c0_i32_3 : i32
    %8 = arith.extui %7 : i1 to i32
    %c0_i32_4 = arith.constant 0 : i32
    %9 = arith.cmpi ne, %8, %c0_i32_4 : i32
    scf.if %9 {
      %cst_21 = arith.constant 0.000000e+00 : f32
      %39 = vector.broadcast %cst_21 : f32 to vector<128x128xf32>
      %c0_22 = arith.constant 0 : index
      %c0_23 = arith.constant 0 : index
      %40 = vector.load %arg18[%c0_22, %c0_23] : memref<128x128xf32, #tpu.memory_space<vmem>>, vector<128x128xf32>
      tpu.vector_store %arg18[%c0_22, %c0_23], %39 {strides = array<i32>} : memref<128x128xf32, #tpu.memory_space<vmem>>, vector<128x128xf32>,
    } else {
    }
    %c128_i32 = arith.constant 128 : i32
    %10 = arith.muli %arg2, %c128_i32 : i32
    %11 = tpu.assume_multiple %10, 128 : i32
    %c128_i32_5 = arith.constant 128 : i32
    %12 = arith.muli %arg1, %c128_i32_5 : i32
    %13 = tpu.assume_multiple %12, 128 : i32
    %c0 = arith.constant 0 : index
    %c0_6 = arith.constant 0 : index
    %14 = vector.load %arg18[%c0, %c0_6] : memref<128x128xf32, #tpu.memory_space<vmem>>, vector<128x128xf32>
    %c0_7 = arith.constant 0 : index
    %c0_8 = arith.constant 0 : index
    %15 = vector.load %arg3[%c0_7, %c0_8] : memref<128x128xbf16, #tpu.memory_space<vmem>>, vector<128x128xbf16>
    %c0_9 = arith.constant 0 : index
    %16 = arith.index_cast %11 : i32 to index
    %c0_10 = arith.constant 0 : index
    %17 = vector.load %arg17[%c0_9, %16, %c0_10] : memref<2x256x128xbf16, #tpu.memory_space<vmem>>, vector<1x128x128xbf16>
    %18 = vector.shape_cast %17 : vector<1x128x128xbf16> to vector<128x128xbf16>
    %cst = arith.constant dense<0.000000e+00> : vector<128x128xf32>
    %19 = tpu.matmul %15, %18, %cst {dimension_numbers = #tpu.dot_dimension_numbers<[1], [0], [0], [1], [0, 0, 1, 1], [], []>} : vector<128x128xbf16>, vector<128x128xbf16>, vector<128x128xf32> -> vector<128x128xf32>
    %20 = arith.addf %14, %19 : vector<128x128xf32>
    %c0_11 = arith.constant 0 : index
    %c0_12 = arith.constant 0 : index
    %21 = vector.load %arg18[%c0_11, %c0_12] : memref<128x128xf32, #tpu.memory_space<vmem>>, vector<128x128xf32>
    tpu.vector_store %arg18[%c0_11, %c0_12], %20 {strides = array<i32>} : memref<128x128xf32, #tpu.memory_space<vmem>>, vector<128x128xf32>,
    %c1_i32 = arith.constant 1 : i32
    %22 = arith.cmpi eq, %arg2, %c1_i32 : i32
    %23 = arith.extui %22 : i1 to i32
    %c0_i32_13 = arith.constant 0 : i32
    %24 = arith.cmpi ne, %23, %c0_i32_13 : i32
    scf.if %24 {
      %c0_21 = arith.constant 0 : index
      %39 = arith.index_cast %13 : i32 to index
      %c0_22 = arith.constant 0 : index
      %40 = vector.load %arg17[%c0_21, %39, %c0_22] : memref<2x256x128xbf16, #tpu.memory_space<vmem>>, vector<1x128x128xbf16>
      %41 = vector.shape_cast %40 : vector<1x128x128xbf16> to vector<128x128xbf16>
      %42 = arith.extf %41 : vector<128x128xbf16> to vector<128x128xf32>
      %c0_23 = arith.constant 0 : index
      %c0_24 = arith.constant 0 : index
      %43 = vector.load %arg18[%c0_23, %c0_24] : memref<128x128xf32, #tpu.memory_space<vmem>>, vector<128x128xf32>
      %44 = arith.addf %42, %43 : vector<128x128xf32>
      %45 = arith.truncf %44 : vector<128x128xf32> to vector<128x128xbf16>
      %c0_25 = arith.constant 0 : index
      %c0_26 = arith.constant 0 : index
      %c0_27 = arith.constant 0 : index
      %46 = vector.load %arg5[%c0_25, %c0_26, %c0_27] : memref<1x128x128xbf16, #tpu.memory_space<vmem>>, vector<1x128x128xbf16>
      %47 = vector.shape_cast %46 : vector<1x128x128xbf16> to vector<128x128xbf16>
      %cst_28 = arith.constant dense<0.000000e+00> : vector<128x128xf32>
      %48 = tpu.matmul %45, %47, %cst_28 {dimension_numbers = #tpu.dot_dimension_numbers<[1], [0], [0], [1], [0, 0, 1, 1], [], []>} : vector<128x128xbf16>, vector<128x128xbf16>, vector<128x128xf32> -> vector<128x128xf32>
      %c0_29 = arith.constant 0 : index
      %c0_30 = arith.constant 0 : index
      %c0_31 = arith.constant 0 : index
      %49 = vector.load %arg6[%c0_29, %c0_30, %c0_31] : memref<1x1x128xf32, #tpu.memory_space<vmem>>, vector<1x1x128xf32>
      %50 = vector.shape_cast %49 : vector<1x1x128xf32> to vector<1x128xf32>
      %51 = vector.broadcast %50 : vector<1x128xf32> to vector<128x128xf32>
      %52 = arith.addf %48, %51 : vector<128x128xf32>
      %cst_32 = arith.constant 0.000000e+00 : f32
      %53 = vector.broadcast %cst_32 : f32 to vector<128x128xf32>
      %54 = arith.maximumf %52, %53 : vector<128x128xf32>
      %55 = arith.truncf %54 : vector<128x128xf32> to vector<128x128xbf16>
      %c0_33 = arith.constant 0 : index
      %c0_34 = arith.constant 0 : index
      %c0_35 = arith.constant 0 : index
      %56 = vector.load %arg7[%c0_33, %c0_34, %c0_35] : memref<1x128x128xbf16, #tpu.memory_space<vmem>>, vector<1x128x128xbf16>
      %57 = vector.shape_cast %56 : vector<1x128x128xbf16> to vector<128x128xbf16>
      %cst_36 = arith.constant dense<0.000000e+00> : vector<128x128xf32>
      %58 = tpu.matmul %55, %57, %cst_36 {dimension_numbers = #tpu.dot_dimension_numbers<[1], [0], [0], [1], [0, 0, 1, 1], [], []>} : vector<128x128xbf16>, vector<128x128xbf16>, vector<128x128xf32> -> vector<128x128xf32>
      %c0_37 = arith.constant 0 : index
      %c0_38 = arith.constant 0 : index
      %c0_39 = arith.constant 0 : index
      %59 = vector.load %arg8[%c0_37, %c0_38, %c0_39] : memref<1x1x128xf32, #tpu.memory_space<vmem>>, vector<1x1x128xf32>
      %60 = vector.shape_cast %59 : vector<1x1x128xf32> to vector<1x128xf32>
      %61 = vector.broadcast %60 : vector<1x128xf32> to vector<128x128xf32>
      %62 = arith.addf %58, %61 : vector<128x128xf32>
      %cst_40 = arith.constant 0.000000e+00 : f32
      %63 = vector.broadcast %cst_40 : f32 to vector<128x128xf32>
      %64 = arith.maximumf %62, %63 : vector<128x128xf32>
      %65 = arith.truncf %64 : vector<128x128xf32> to vector<128x128xbf16>
      %c1 = arith.constant 1 : index
      %66 = arith.index_cast %13 : i32 to index
      %c0_41 = arith.constant 0 : index
      %67 = vector.load %arg17[%c1, %66, %c0_41] : memref<2x256x128xbf16, #tpu.memory_space<vmem>>, vector<1x128x128xbf16>
      %68 = vector.shape_cast %67 : vector<1x128x128xbf16> to vector<128x128xbf16>
      %69 = vector.shape_cast %65 : vector<128x128xbf16> to vector<1x128x128xbf16>
      tpu.vector_store %arg17[%c1, %66, %c0_41], %69 {strides = array<i32>} : memref<2x256x128xbf16, #tpu.memory_space<vmem>>, vector<1x128x128xbf16>,
      %c0_42 = arith.constant 0 : index
      %c0_43 = arith.constant 0 : index
      %c0_44 = arith.constant 0 : index
      %70 = vector.load %arg9[%c0_42, %c0_43, %c0_44] : memref<1x128x128xbf16, #tpu.memory_space<vmem>>, vector<1x128x128xbf16>
      %71 = vector.shape_cast %70 : vector<1x128x128xbf16> to vector<128x128xbf16>
      %cst_45 = arith.constant dense<0.000000e+00> : vector<128x128xf32>
      %72 = tpu.matmul %65, %71, %cst_45 {dimension_numbers = #tpu.dot_dimension_numbers<[1], [0], [0], [1], [0, 0, 1, 1], [], []>} : vector<128x128xbf16>, vector<128x128xbf16>, vector<128x128xf32> -> vector<128x128xf32>
      %c0_46 = arith.constant 0 : index
      %c0_47 = arith.constant 0 : index
      %73 = vector.load %arg19[%c0_46, %c0_47] : memref<8x128xf32, #tpu.memory_space<vmem>>, vector<8x128xf32>
      %c0_48 = arith.constant 0 : index
      %c0_49 = arith.constant 0 : index
      %74 = vector.load %arg10[%c0_48, %c0_49] : memref<8x128xbf16, #tpu.memory_space<vmem>>, vector<8x128xbf16>
      %75 = arith.truncf %72 : vector<128x128xf32> to vector<128x128xbf16>
      %cst_50 = arith.constant dense<0.000000e+00> : vector<8x128xf32>
      %76 = tpu.matmul %74, %75, %cst_50 {dimension_numbers = #tpu.dot_dimension_numbers<[1], [0], [0], [1], [0, 0, 1, 1], [], []>} : vector<8x128xbf16>, vector<128x128xbf16>, vector<8x128xf32> -> vector<8x128xf32>
      %77 = arith.addf %73, %76 : vector<8x128xf32>
      %c0_51 = arith.constant 0 : index
      %c0_52 = arith.constant 0 : index
      %78 = vector.load %arg19[%c0_51, %c0_52] : memref<8x128xf32, #tpu.memory_space<vmem>>, vector<8x128xf32>
      tpu.vector_store %arg19[%c0_51, %c0_52], %77 {strides = array<i32>} : memref<8x128xf32, #tpu.memory_space<vmem>>, vector<8x128xf32>,
    } else {
    }
    %c1_i32_14 = arith.constant 1 : i32
    %25 = arith.cmpi eq, %arg2, %c1_i32_14 : i32
    %c1_i32_15 = arith.constant 1 : i32
    %26 = arith.cmpi eq, %arg1, %c1_i32_15 : i32
    %27 = arith.andi %25, %26 : i1
    %c2_i32 = arith.constant 2 : i32
    %28 = arith.cmpi slt, %arg0, %c2_i32 : i32
    %29 = arith.andi %27, %28 : i1
    %30 = arith.extui %29 : i1 to i32
    %c0_i32_16 = arith.constant 0 : i32
    %31 = arith.cmpi ne, %30, %c0_i32_16 : i32
    scf.if %31 {
      %c1 = arith.constant 1 : index
      %c0_21 = arith.constant 0 : index
      %c0_22 = arith.constant 0 : index
      %39 = vector.load %arg17[%c1, %c0_21, %c0_22] : memref<2x256x128xbf16, #tpu.memory_space<vmem>>, vector<1x256x128xbf16>
      %40 = vector.shape_cast %39 : vector<1x256x128xbf16> to vector<256x128xbf16>
      %c0_23 = arith.constant 0 : index
      %c0_24 = arith.constant 0 : index
      %c0_25 = arith.constant 0 : index
      %41 = vector.load %arg17[%c0_23, %c0_24, %c0_25] : memref<2x256x128xbf16, #tpu.memory_space<vmem>>, vector<1x256x128xbf16>
      %42 = vector.shape_cast %41 : vector<1x256x128xbf16> to vector<256x128xbf16>
      %43 = vector.shape_cast %40 : vector<256x128xbf16> to vector<1x256x128xbf16>
      tpu.vector_store %arg17[%c0_23, %c0_24, %c0_25], %43 {strides = array<i32>} : memref<2x256x128xbf16, #tpu.memory_space<vmem>>, vector<1x256x128xbf16>,
    } else {
    }
    %c2_i32_17 = arith.constant 2 : i32
    %32 = arith.cmpi eq, %arg0, %c2_i32_17 : i32
    %c1_i32_18 = arith.constant 1 : i32
    %33 = arith.cmpi eq, %arg1, %c1_i32_18 : i32
    %34 = arith.andi %32, %33 : i1
    %c1_i32_19 = arith.constant 1 : i32
    %35 = arith.cmpi eq, %arg2, %c1_i32_19 : i32
    %36 = arith.andi %34, %35 : i1
    %37 = arith.extui %36 : i1 to i32
    %c0_i32_20 = arith.constant 0 : i32
    %38 = arith.cmpi ne, %37, %c0_i32_20 : i32
    scf.if %38 {
      %c0_21 = arith.constant 0 : index
      %c0_22 = arith.constant 0 : index
      %39 = vector.load %arg19[%c0_21, %c0_22] : memref<8x128xf32, #tpu.memory_space<vmem>>, vector<8x128xf32>
      %c0_23 = arith.constant 0 : index
      %c0_24 = arith.constant 0 : index
      %40 = vector.load %arg11[%c0_23, %c0_24] : memref<8x128xf32, #tpu.memory_space<vmem>>, vector<8x128xf32>
      %41 = arith.addf %39, %40 : vector<8x128xf32>
      %42 = arith.truncf %41 : vector<8x128xf32> to vector<8x128xbf16>
      %c0_25 = arith.constant 0 : index
      %c0_26 = arith.constant 0 : index
      %43 = vector.load %arg12[%c0_25, %c0_26] : memref<128x128xbf16, #tpu.memory_space<vmem>>, vector<128x128xbf16>
      %cst_27 = arith.constant dense<0.000000e+00> : vector<8x128xf32>
      %44 = tpu.matmul %42, %43, %cst_27 {dimension_numbers = #tpu.dot_dimension_numbers<[1], [0], [0], [1], [0, 0, 1, 1], [], []>} : vector<8x128xbf16>, vector<128x128xbf16>, vector<8x128xf32> -> vector<8x128xf32>
      %c0_28 = arith.constant 0 : index
      %c0_29 = arith.constant 0 : index
      %45 = vector.load %arg13[%c0_28, %c0_29] : memref<1x128xf32, #tpu.memory_space<vmem>>, vector<1x128xf32>
      %46 = vector.broadcast %45 : vector<1x128xf32> to vector<8x128xf32>
      %47 = arith.addf %44, %46 : vector<8x128xf32>
      %cst_30 = arith.constant 0.000000e+00 : f32
      %48 = vector.broadcast %cst_30 : f32 to vector<8x128xf32>
      %49 = arith.maximumf %47, %48 : vector<8x128xf32>
      %50 = arith.truncf %49 : vector<8x128xf32> to vector<8x128xbf16>
      %c0_31 = arith.constant 0 : index
      %c0_32 = arith.constant 0 : index
      %51 = vector.load %arg14[%c0_31, %c0_32] : memref<128x128xbf16, #tpu.memory_space<vmem>>, vector<128x128xbf16>
      %cst_33 = arith.constant dense<0.000000e+00> : vector<8x128xf32>
      %52 = tpu.matmul %50, %51, %cst_33 {dimension_numbers = #tpu.dot_dimension_numbers<[1], [0], [0], [1], [0, 0, 1, 1], [], []>} : vector<8x128xbf16>, vector<128x128xbf16>, vector<8x128xf32> -> vector<8x128xf32>
      %c0_34 = arith.constant 0 : index
      %c0_35 = arith.constant 0 : index
      %53 = vector.load %arg15[%c0_34, %c0_35] : memref<1x128xf32, #tpu.memory_space<vmem>>, vector<1x128xf32>
      %54 = vector.broadcast %53 : vector<1x128xf32> to vector<8x128xf32>
      %55 = arith.addf %52, %54 : vector<8x128xf32>
      %c0_36 = arith.constant 0 : index
      %c0_37 = arith.constant 0 : index
      %56 = vector.load %arg16[%c0_36, %c0_37] : memref<8x128xf32, #tpu.memory_space<vmem>>, vector<8x128xf32>
      tpu.vector_store %arg16[%c0_36, %c0_37], %55 {strides = array<i32>} : memref<8x128xf32, #tpu.memory_space<vmem>>, vector<8x128xf32>,
    } else {
    }
    return
  }
  func.func @transform_0(%arg0: i32, %arg1: i32, %arg2: i32) -> (i32, i32) {
    %c0_i32 = arith.constant 0 : i32
    return %arg1, %arg2 : i32, i32
  }
  func.func @transform_1(%arg0: i32, %arg1: i32, %arg2: i32) -> (i32, i32) {
    %c0_i32 = arith.constant 0 : i32
    %c0_i32_0 = arith.constant 0 : i32
    %c0_i32_1 = arith.constant 0 : i32
    return %c0_i32, %c0_i32_0 : i32, i32
  }
  func.func @transform_2(%arg0: i32, %arg1: i32, %arg2: i32) -> (i32, i32, i32) {
    %c0_i32 = arith.constant 0 : i32
    %c0_i32_0 = arith.constant 0 : i32
    %c0_i32_1 = arith.constant 0 : i32
    return %arg0, %c0_i32, %c0_i32_0 : i32, i32, i32
  }
  func.func @transform_3(%arg0: i32, %arg1: i32, %arg2: i32) -> (i32, i32, i32) {
    %c0_i32 = arith.constant 0 : i32
    %c0_i32_0 = arith.constant 0 : i32
    %c0_i32_1 = arith.constant 0 : i32
    return %arg0, %c0_i32, %c0_i32_0 : i32, i32, i32
  }
  func.func @transform_4(%arg0: i32, %arg1: i32, %arg2: i32) -> (i32, i32, i32) {
    %c0_i32 = arith.constant 0 : i32
    %c0_i32_0 = arith.constant 0 : i32
    %c0_i32_1 = arith.constant 0 : i32
    return %arg0, %c0_i32, %c0_i32_0 : i32, i32, i32
  }
  func.func @transform_5(%arg0: i32, %arg1: i32, %arg2: i32) -> (i32, i32, i32) {
    %c0_i32 = arith.constant 0 : i32
    %c0_i32_0 = arith.constant 0 : i32
    %c0_i32_1 = arith.constant 0 : i32
    return %arg0, %c0_i32, %c0_i32_0 : i32, i32, i32
  }
  func.func @transform_6(%arg0: i32, %arg1: i32, %arg2: i32) -> (i32, i32, i32) {
    %c0_i32 = arith.constant 0 : i32
    %c0_i32_0 = arith.constant 0 : i32
    %c0_i32_1 = arith.constant 0 : i32
    return %arg0, %c0_i32, %c0_i32_0 : i32, i32, i32
  }
  func.func @transform_7(%arg0: i32, %arg1: i32, %arg2: i32) -> (i32, i32) {
    %c0_i32 = arith.constant 0 : i32
    %c0_i32_0 = arith.constant 0 : i32
    return %c0_i32, %arg1 : i32, i32
  }
  func.func @transform_8(%arg0: i32, %arg1: i32, %arg2: i32) -> (i32, i32) {
    %c0_i32 = arith.constant 0 : i32
    %c0_i32_0 = arith.constant 0 : i32
    %c0_i32_1 = arith.constant 0 : i32
    return %c0_i32, %c0_i32_0 : i32, i32
  }
  func.func @transform_9(%arg0: i32, %arg1: i32, %arg2: i32) -> (i32, i32) {
    %c0_i32 = arith.constant 0 : i32
    %c0_i32_0 = arith.constant 0 : i32
    %c0_i32_1 = arith.constant 0 : i32
    return %c0_i32, %c0_i32_0 : i32, i32
  }
  func.func @transform_10(%arg0: i32, %arg1: i32, %arg2: i32) -> (i32, i32) {
    %c0_i32 = arith.constant 0 : i32
    %c0_i32_0 = arith.constant 0 : i32
    %c0_i32_1 = arith.constant 0 : i32
    return %c0_i32, %c0_i32_0 : i32, i32
  }
  func.func @transform_11(%arg0: i32, %arg1: i32, %arg2: i32) -> (i32, i32) {
    %c0_i32 = arith.constant 0 : i32
    %c0_i32_0 = arith.constant 0 : i32
    %c0_i32_1 = arith.constant 0 : i32
    return %c0_i32, %c0_i32_0 : i32, i32
  }
  func.func @transform_12(%arg0: i32, %arg1: i32, %arg2: i32) -> (i32, i32) {
    %c0_i32 = arith.constant 0 : i32
    %c0_i32_0 = arith.constant 0 : i32
    %c0_i32_1 = arith.constant 0 : i32
    return %c0_i32, %c0_i32_0 : i32, i32
  }
  func.func @transform_13(%arg0: i32, %arg1: i32, %arg2: i32) -> (i32, i32) {
    %c0_i32 = arith.constant 0 : i32
    %c0_i32_0 = arith.constant 0 : i32
    %c0_i32_1 = arith.constant 0 : i32
    return %c0_i32, %c0_i32_0 : i32, i32
  }
}

</mosaic_0001>

<llo_original>
// kernel: tpu_custom_call.1
$region0: #{tpu_custom_call.1}
  #allocation0 [shape = 'u32[]', space=smem, size = 0x4, offset = 0x4, fixed_abs, tag = 'smem constant byte address 0x4 - core index']
  #allocation1 [shape = 'u32[144,128]{1,0:T(1,128)}', space=vmem, size = 0x12000, scoped, tag = 'internal scratch']
  #allocation2 [shape = 'bf16[2,256,128]{2,1,0:T(16,128)(2,1)}', space=vmem, size = 0x20000, scoped, tag = 'scratch operand']
  #allocation3 [shape = 'f32[128,128]{1,0:T(8,128)}', space=vmem, size = 0x10000, scoped, tag = 'scratch operand']
  #allocation4 [shape = 'f32[8,128]{1,0:T(8,128)}', space=vmem, size = 0x1000, scoped, tag = 'scratch operand']
  %s0 = inlined_call_operand.hbm [shape: bf16[256,256], index: 0, kind: input, shape index: {}]
  %s1 = inlined_call_operand.hbm [shape: bf16[256,128], index: 1, kind: input, shape index: {}]
  %s2 = inlined_call_operand.hbm [shape: bf16[3,128,128], index: 2, kind: input, shape index: {}]
  %s3 = inlined_call_operand.hbm [shape: f32[3,1,128], index: 3, kind: input, shape index: {}]
  %s4 = inlined_call_operand.hbm [shape: bf16[3,128,128], index: 4, kind: input, shape index: {}]
  %s5 = inlined_call_operand.hbm [shape: f32[3,1,128], index: 5, kind: input, shape index: {}]
  %s6 = inlined_call_operand.hbm [shape: bf16[3,128,128], index: 6, kind: input, shape index: {}]
  %s7 = inlined_call_operand.vmem [shape: bf16[8,256], index: 7, kind: input, shape index: {}]
  %s8 = inlined_call_operand.vmem [shape: f32[8,128], index: 8, kind: input, shape index: {}]
  %s9 = inlined_call_operand.hbm [shape: bf16[128,128], index: 9, kind: input, shape index: {}]
  %s10 = inlined_call_operand.vmem [shape: f32[1,128], index: 10, kind: input, shape index: {}]
  %s11 = inlined_call_operand.hbm [shape: bf16[128,128], index: 11, kind: input, shape index: {}]
  %s12 = inlined_call_operand.vmem [shape: f32[1,128], index: 12, kind: input, shape index: {}]
  %s13 = inlined_call_operand.hbm [shape: f32[8,128], index: 13, kind: output, shape index: {}]
  %s14 = sld [smem:[#allocation0]]
  $region141: #{tpu_custom_call.1} parent=0
    _
  %s16 = ssub.s32 1, %s14
  %s17 = scalar_select 0, %s16, %s14
  $region1: #{tpu_custom_call.1} parent=0
    #allocation5 [shape = 'u8[65536]{0}', space=vmem, size = 0x10000, scoped, tag = 'input window, operand 0']
    #allocation6 [shape = 's32[2]{0}', space=sflag, size = 0x8, scoped, tag = 'scoped memory for tpu_custom_call.1']
    #allocation7 [shape = 's32[2]{0}', space=sflag, size = 0x8, scoped, tag = 'scoped memory for tpu_custom_call.1']
    #allocation8 [shape = 'u8[65536]{0}', space=vmem, size = 0x10000, scoped, tag = 'input window, operand 1, single buffered']
    #allocation9 [shape = 's32[1]{0}', space=sflag, size = 0x4, scoped, tag = 'scoped memory for tpu_custom_call.1']
    #allocation10 [shape = 'u8[65536]{0}', space=vmem, size = 0x10000, scoped, tag = 'input window, operand 2']
    #allocation11 [shape = 'u8[1024]{0}', space=vmem, size = 0x400, scoped, tag = 'input window, operand 3']
    #allocation12 [shape = 'u8[65536]{0}', space=vmem, size = 0x10000, scoped, tag = 'input window, operand 4']
    #allocation13 [shape = 'u8[1024]{0}', space=vmem, size = 0x400, scoped, tag = 'input window, operand 5']
    #allocation14 [shape = 'u8[65536]{0}', space=vmem, size = 0x10000, scoped, tag = 'input window, operand 6']
    #allocation15 [shape = 'u8[32768]{0}', space=vmem, size = 0x8000, scoped, tag = 'input window, operand 9, single buffered']
    #allocation16 [shape = 'u8[32768]{0}', space=vmem, size = 0x8000, scoped, tag = 'input window, operand 11, single buffered']
    #allocation17 [shape = 's32[1]{0}', space=sflag, size = 0x4, scoped, tag = 'scoped memory for tpu_custom_call.1']
    #allocation18 [shape = 'u8[4096]{0}', space=vmem, size = 0x1000, scoped, tag = 'output window, operand 0, single buffered']
    %18 = vsyncpa [#allocation6], 0
    %s19 = scalar_lea.sflag [#allocation6], 1
    %20 = vsyncpa %s19, 0
    %21 = vsyncpa [#allocation9], 0
    %22 = vsyncpa [#allocation17], 0
    %23 = vsyncpa [#allocation7], 0
    loop: start=0, step=1, limit=14
    $region2: #{tpu_custom_call.1} parent=1 // loop_pre_header
      _
    $region3: #{tpu_custom_call.1} parent=1 // loop_header
      %s25 = sphi 0, %s29
      %p26 = scmp.ge.s32.totalorder %s25, 14
      %s32 = sphi 0, %s51
      %s33 = sphi 0, %s47
      %s34 = sphi 0, %s43
      %s35 = sphi 0, %s32
      %s36 = sphi 0, %s33
      %s37 = sphi 0, %s34
      %s38 = sphi 0, %s35
      %s39 = sphi 0, %s36
      %s40 = sphi 0, %s37
      %s56 = sphi 0, %s58
      %s59 = sphi 0, %s56
      %s60 = sphi 0, %s59
      %s76 = sphi 0, %s60
      %s80 = sphi 0, %s80
      %s82 = sphi 0, %s80
      %s83 = sphi 0, %s82
      %s97 = sphi 0, %s83
      %s103 = sphi 0, %s105
      %s106 = sphi 0, %s103
      %s107 = sphi 0, %s106
      %s123 = sphi 0, %s107
      %s129 = sphi 0, %s131
      %s132 = sphi 0, %s129
      %s133 = sphi 0, %s132
      %s149 = sphi 0, %s133
      %s155 = sphi 0, %s157
      %s158 = sphi 0, %s155
      %s159 = sphi 0, %s158
      %s175 = sphi 0, %s159
      %s181 = sphi 0, %s183
      %s184 = sphi 0, %s181
      %s185 = sphi 0, %s184
      %s201 = sphi 0, %s185
      %s207 = sphi 0, %s209
      %s210 = sphi 0, %s207
      %s211 = sphi 0, %s210
      %s227 = sphi 0, %s211
      %s233 = sphi 0, %s235
      %s236 = sphi 0, %s233
      %s237 = sphi 0, %s236
      %s253 = sphi 0, %s237
      %s257 = sphi 0, %s257
      %s259 = sphi 0, %s257
      %s260 = sphi 0, %s259
      %s274 = sphi 0, %s260
      %s278 = sphi 0, %s278
      %s280 = sphi 0, %s278
      %s281 = sphi 0, %s280
      %s295 = sphi 0, %s281
      %s299 = sphi 0, %s299
      %s301 = sphi 0, %s299
      %s302 = sphi 0, %s301
      %s316 = sphi 0, %s302
      %s320 = sphi 0, %s320
      %s322 = sphi 0, %s320
      %s323 = sphi 0, %s322
      %s337 = sphi 0, %s323
      %s341 = sphi 0, %s341
      %s343 = sphi 0, %s341
      %s344 = sphi 0, %s343
      %s358 = sphi 0, %s344
      %s362 = sphi 0, %s362
      %s364 = sphi 0, %s362
      %s365 = sphi 0, %s364
      %s379 = sphi 0, %s365
    $region4: #{tpu_custom_call.1} parent=1 // loop_header_branch
      %28 = sbr.rel (%p26) target = $region8
    $region5: #{tpu_custom_call.1} parent=1 // loop_body
      %s30 = ssub.s32 %s25, 1
      %s31 = ssub.s32 %s25, 2
      %s41 = sadd.s32 1, %s34
      %p42 = scmp.ge.s32.totalorder %s41, 2
      %s43 = scalar_select %p42, 0, %s41
      %s44 = sadd.s32 1, %s33
      %s45 = scalar_select %p42, %s44, %s33
      %p46 = scmp.ge.s32.totalorder %s45, 2
      %s47 = scalar_select %p46, 0, %s45
      %s48 = sadd.s32 1, %s32
      %s49 = scalar_select %p46, %s48, %s32
      %p50 = scmp.ge.s32.totalorder %s49, 3
      %s51 = scalar_select %p50, 0, %s49
      %s52 = ssub.s32 %s33, %s47
      %s53 = ssub.s32 %s34, %s43
      %s54 = sor.u32 %s52, %s53
      %p55 = scmp.eq.s32.totalorder %s54, 0
      %s57 = sadd.s32 %s56, 1
      %s58 = scalar_select %p55, %s56, %s57
      %p61 = pneg %p55
      %p62 = scmp.eq.s32.totalorder %s25, 11
      %p63 = por %p61, %p62
      %p64 = scmp.ne.s32.totalorder %s56, %s59
      %p65 = scmp.eq.s32.totalorder %s25, 0
      %p66 = por %p64, %p65
      %p67 = scmp.ne.s32.totalorder %s56, %s59
      %p68 = scmp.eq.s32.totalorder %s30, 11
      %p69 = por %p67, %p68
      %p70 = scmp.ne.s32.totalorder %s59, %s60
      %p71 = scmp.eq.s32.totalorder %s30, 0
      %p72 = por %p70, %p71
      %p73 = scmp.ne.s32.totalorder %s59, %s60
      %p74 = scmp.eq.s32.totalorder %s31, 11
      %p75 = por %p73, %p74
      %p77 = scmp.ne.s32.totalorder %s60, %s76
      %p78 = scmp.eq.s32.totalorder %s31, 0
      %p79 = por %p77, %p78
      %s81 = sadd.s32 %s80, 1
      %p84 = scmp.eq.s32.totalorder %s25, 11
      %p85 = scmp.ne.s32.totalorder %s80, %s82
      %p86 = scmp.eq.s32.totalorder %s25, 0
      %p87 = por %p85, %p86
      %p88 = scmp.ne.s32.totalorder %s80, %s82
      %p89 = scmp.eq.s32.totalorder %s30, 11
      %p90 = por %p88, %p89
      %p91 = scmp.ne.s32.totalorder %s82, %s83
      %p92 = scmp.eq.s32.totalorder %s30, 0
      %p93 = por %p91, %p92
      %p94 = scmp.ne.s32.totalorder %s82, %s83
      %p95 = scmp.eq.s32.totalorder %s31, 11
      %p96 = por %p94, %p95
      %p98 = scmp.ne.s32.totalorder %s83, %s97
      %p99 = scmp.eq.s32.totalorder %s31, 0
      %p100 = por %p98, %p99
      %s101 = ssub.s32 %s32, %s51
      %p102 = scmp.eq.s32.totalorder %s101, 0
      %s104 = sadd.s32 %s103, 1
      %s105 = scalar_select %p102, %s103, %s104
      %p108 = pneg %p102
      %p109 = scmp.eq.s32.totalorder %s25, 11
      %p110 = por %p108, %p109
      %p111 = scmp.ne.s32.totalorder %s103, %s106
      %p112 = scmp.eq.s32.totalorder %s25, 0
      %p113 = por %p111, %p112
      %p114 = scmp.ne.s32.totalorder %s103, %s106
      %p115 = scmp.eq.s32.totalorder %s30, 11
      %p116 = por %p114, %p115
      %p117 = scmp.ne.s32.totalorder %s106, %s107
      %p118 = scmp.eq.s32.totalorder %s30, 0
      %p119 = por %p117, %p118
      %p120 = scmp.ne.s32.totalorder %s106, %s107
      %p121 = scmp.eq.s32.totalorder %s31, 11
      %p122 = por %p120, %p121
      %p124 = scmp.ne.s32.totalorder %s107, %s123
      %p125 = scmp.eq.s32.totalorder %s31, 0
      %p126 = por %p124, %p125
      %s127 = ssub.s32 %s32, %s51
      %p128 = scmp.eq.s32.totalorder %s127, 0
      %s130 = sadd.s32 %s129, 1
      %s131 = scalar_select %p128, %s129, %s130
      %p134 = pneg %p128
      %p135 = scmp.eq.s32.totalorder %s25, 11
      %p136 = por %p134, %p135
      %p137 = scmp.ne.s32.totalorder %s129, %s132
      %p138 = scmp.eq.s32.totalorder %s25, 0
      %p139 = por %p137, %p138
      %p140 = scmp.ne.s32.totalorder %s129, %s132
      %p141 = scmp.eq.s32.totalorder %s30, 11
      %p142 = por %p140, %p141
      %p143 = scmp.ne.s32.totalorder %s132, %s133
      %p144 = scmp.eq.s32.totalorder %s30, 0
      %p145 = por %p143, %p144
      %p146 = scmp.ne.s32.totalorder %s132, %s133
      %p147 = scmp.eq.s32.totalorder %s31, 11
      %p148 = por %p146, %p147
      %p150 = scmp.ne.s32.totalorder %s133, %s149
      %p151 = scmp.eq.s32.totalorder %s31, 0
      %p152 = por %p150, %p151
      %s153 = ssub.s32 %s32, %s51
      %p154 = scmp.eq.s32.totalorder %s153, 0
      %s156 = sadd.s32 %s155, 1
      %s157 = scalar_select %p154, %s155, %s156
      %p160 = pneg %p154
      %p161 = scmp.eq.s32.totalorder %s25, 11
      %p162 = por %p160, %p161
      %p163 = scmp.ne.s32.totalorder %s155, %s158
      %p164 = scmp.eq.s32.totalorder %s25, 0
      %p165 = por %p163, %p164
      %p166 = scmp.ne.s32.totalorder %s155, %s158
      %p167 = scmp.eq.s32.totalorder %s30, 11
      %p168 = por %p166, %p167
      %p169 = scmp.ne.s32.totalorder %s158, %s159
      %p170 = scmp.eq.s32.totalorder %s30, 0
      %p171 = por %p169, %p170
      %p172 = scmp.ne.s32.totalorder %s158, %s159
      %p173 = scmp.eq.s32.totalorder %s31, 11
      %p174 = por %p172, %p173
      %p176 = scmp.ne.s32.totalorder %s159, %s175
      %p177 = scmp.eq.s32.totalorder %s31, 0
      %p178 = por %p176, %p177
      %s179 = ssub.s32 %s32, %s51
      %p180 = scmp.eq.s32.totalorder %s179, 0
      %s182 = sadd.s32 %s181, 1
      %s183 = scalar_select %p180, %s181, %s182
      %p186 = pneg %p180
      %p187 = scmp.eq.s32.totalorder %s25, 11
      %p188 = por %p186, %p187
      %p189 = scmp.ne.s32.totalorder %s181, %s184
      %p190 = scmp.eq.s32.totalorder %s25, 0
      %p191 = por %p189, %p190
      %p192 = scmp.ne.s32.totalorder %s181, %s184
      %p193 = scmp.eq.s32.totalorder %s30, 11
      %p194 = por %p192, %p193
      %p195 = scmp.ne.s32.totalorder %s184, %s185
      %p196 = scmp.eq.s32.totalorder %s30, 0
      %p197 = por %p195, %p196
      %p198 = scmp.ne.s32.totalorder %s184, %s185
      %p199 = scmp.eq.s32.totalorder %s31, 11
      %p200 = por %p198, %p199
      %p202 = scmp.ne.s32.totalorder %s185, %s201
      %p203 = scmp.eq.s32.totalorder %s31, 0
      %p204 = por %p202, %p203
      %s205 = ssub.s32 %s32, %s51
      %p206 = scmp.eq.s32.totalorder %s205, 0
      %s208 = sadd.s32 %s207, 1
      %s209 = scalar_select %p206, %s207, %s208
      %p212 = pneg %p206
      %p213 = scmp.eq.s32.totalorder %s25, 11
      %p214 = por %p212, %p213
      %p215 = scmp.ne.s32.totalorder %s207, %s210
      %p216 = scmp.eq.s32.totalorder %s25, 0
      %p217 = por %p215, %p216
      %p218 = scmp.ne.s32.totalorder %s207, %s210
      %p219 = scmp.eq.s32.totalorder %s30, 11
      %p220 = por %p218, %p219
      %p221 = scmp.ne.s32.totalorder %s210, %s211
      %p222 = scmp.eq.s32.totalorder %s30, 0
      %p223 = por %p221, %p222
      %p224 = scmp.ne.s32.totalorder %s210, %s211
      %p225 = scmp.eq.s32.totalorder %s31, 11
      %p226 = por %p224, %p225
      %p228 = scmp.ne.s32.totalorder %s211, %s227
      %p229 = scmp.eq.s32.totalorder %s31, 0
      %p230 = por %p228, %p229
      %s231 = ssub.s32 %s33, %s47
      %p232 = scmp.eq.s32.totalorder %s231, 0
      %s234 = sadd.s32 %s233, 1
      %s235 = scalar_select %p232, %s233, %s234
      %p238 = pneg %p232
      %p239 = scmp.eq.s32.totalorder %s25, 11
      %p240 = por %p238, %p239
      %p241 = scmp.ne.s32.totalorder %s233, %s236
      %p242 = scmp.eq.s32.totalorder %s25, 0
      %p243 = por %p241, %p242
      %p244 = scmp.ne.s32.totalorder %s233, %s236
      %p245 = scmp.eq.s32.totalorder %s30, 11
      %p246 = por %p244, %p245
      %p247 = scmp.ne.s32.totalorder %s236, %s237
      %p248 = scmp.eq.s32.totalorder %s30, 0
      %p249 = por %p247, %p248
      %p250 = scmp.ne.s32.totalorder %s236, %s237
      %p251 = scmp.eq.s32.totalorder %s31, 11
      %p252 = por %p250, %p251
      %p254 = scmp.ne.s32.totalorder %s237, %s253
      %p255 = scmp.eq.s32.totalorder %s31, 0
      %p256 = por %p254, %p255
      %s258 = sadd.s32 %s257, 1
      %p261 = scmp.eq.s32.totalorder %s25, 11
      %p262 = scmp.ne.s32.totalorder %s257, %s259
      %p263 = scmp.eq.s32.totalorder %s25, 0
      %p264 = por %p262, %p263
      %p265 = scmp.ne.s32.totalorder %s257, %s259
      %p266 = scmp.eq.s32.totalorder %s30, 11
      %p267 = por %p265, %p266
      %p268 = scmp.ne.s32.totalorder %s259, %s260
      %p269 = scmp.eq.s32.totalorder %s30, 0
      %p270 = por %p268, %p269
      %p271 = scmp.ne.s32.totalorder %s259, %s260
      %p272 = scmp.eq.s32.totalorder %s31, 11
      %p273 = por %p271, %p272
      %p275 = scmp.ne.s32.totalorder %s260, %s274
      %p276 = scmp.eq.s32.totalorder %s31, 0
      %p277 = por %p275, %p276
      %s279 = sadd.s32 %s278, 1
      %p282 = scmp.eq.s32.totalorder %s25, 11
      %p283 = scmp.ne.s32.totalorder %s278, %s280
      %p284 = scmp.eq.s32.totalorder %s25, 0
      %p285 = por %p283, %p284
      %p286 = scmp.ne.s32.totalorder %s278, %s280
      %p287 = scmp.eq.s32.totalorder %s30, 11
      %p288 = por %p286, %p287
      %p289 = scmp.ne.s32.totalorder %s280, %s281
      %p290 = scmp.eq.s32.totalorder %s30, 0
      %p291 = por %p289, %p290
      %p292 = scmp.ne.s32.totalorder %s280, %s281
      %p293 = scmp.eq.s32.totalorder %s31, 11
      %p294 = por %p292, %p293
      %p296 = scmp.ne.s32.totalorder %s281, %s295
      %p297 = scmp.eq.s32.totalorder %s31, 0
      %p298 = por %p296, %p297
      %s300 = sadd.s32 %s299, 1
      %p303 = scmp.eq.s32.totalorder %s25, 11
      %p304 = scmp.ne.s32.totalorder %s299, %s301
      %p305 = scmp.eq.s32.totalorder %s25, 0
      %p306 = por %p304, %p305
      %p307 = scmp.ne.s32.totalorder %s299, %s301
      %p308 = scmp.eq.s32.totalorder %s30, 11
      %p309 = por %p307, %p308
      %p310 = scmp.ne.s32.totalorder %s301, %s302
      %p311 = scmp.eq.s32.totalorder %s30, 0
      %p312 = por %p310, %p311
      %p313 = scmp.ne.s32.totalorder %s301, %s302
      %p314 = scmp.eq.s32.totalorder %s31, 11
      %p315 = por %p313, %p314
      %p317 = scmp.ne.s32.totalorder %s302, %s316
      %p318 = scmp.eq.s32.totalorder %s31, 0
      %p319 = por %p317, %p318
      %s321 = sadd.s32 %s320, 1
      %p324 = scmp.eq.s32.totalorder %s25, 11
      %p325 = scmp.ne.s32.totalorder %s320, %s322
      %p326 = scmp.eq.s32.totalorder %s25, 0
      %p327 = por %p325, %p326
      %p328 = scmp.ne.s32.totalorder %s320, %s322
      %p329 = scmp.eq.s32.totalorder %s30, 11
      %p330 = por %p328, %p329
      %p331 = scmp.ne.s32.totalorder %s322, %s323
      %p332 = scmp.eq.s32.totalorder %s30, 0
      %p333 = por %p331, %p332
      %p334 = scmp.ne.s32.totalorder %s322, %s323
      %p335 = scmp.eq.s32.totalorder %s31, 11
      %p336 = por %p334, %p335
      %p338 = scmp.ne.s32.totalorder %s323, %s337
      %p339 = scmp.eq.s32.totalorder %s31, 0
      %p340 = por %p338, %p339
      %s342 = sadd.s32 %s341, 1
      %p345 = scmp.eq.s32.totalorder %s25, 11
      %p346 = scmp.ne.s32.totalorder %s341, %s343
      %p347 = scmp.eq.s32.totalorder %s25, 0
      %p348 = por %p346, %p347
      %p349 = scmp.ne.s32.totalorder %s341, %s343
      %p350 = scmp.eq.s32.totalorder %s30, 11
      %p351 = por %p349, %p350
      %p352 = scmp.ne.s32.totalorder %s343, %s344
      %p353 = scmp.eq.s32.totalorder %s30, 0
      %p354 = por %p352, %p353
      %p355 = scmp.ne.s32.totalorder %s343, %s344
      %p356 = scmp.eq.s32.totalorder %s31, 11
      %p357 = por %p355, %p356
      %p359 = scmp.ne.s32.totalorder %s344, %s358
      %p360 = scmp.eq.s32.totalorder %s31, 0
      %p361 = por %p359, %p360
      %s363 = sadd.s32 %s362, 1
      %p366 = scmp.eq.s32.totalorder %s25, 11
      %p367 = scmp.ne.s32.totalorder %s362, %s364
      %p368 = scmp.eq.s32.totalorder %s25, 0
      %p369 = por %p367, %p368
      %p370 = scmp.ne.s32.totalorder %s362, %s364
      %p371 = scmp.eq.s32.totalorder %s30, 11
      %p372 = por %p370, %p371
      %p373 = scmp.ne.s32.totalorder %s364, %s365
      %p374 = scmp.eq.s32.totalorder %s30, 0
      %p375 = por %p373, %p374
      %p376 = scmp.ne.s32.totalorder %s364, %s365
      %p377 = scmp.eq.s32.totalorder %s31, 11
      %p378 = por %p376, %p377
      %p380 = scmp.ne.s32.totalorder %s365, %s379
      %p381 = scmp.eq.s32.totalorder %s31, 0
      %p382 = por %p380, %p381
      %p383 = scmp.le.s32.totalorder 1, %s25
      %p384 = scmp.lt.s32.totalorder %s25, 13
      %p385 = pnand %p383, %p384
      %p386 = pneg %p385
      // Predicated region
      $region9: #{tpu_custom_call.1} parent=5 // pred_check
        _
      $region10: #{tpu_custom_call.1} parent=5 // pred_check_branch
        %388 = sbr.rel (%p385) target = $region12
      $region11: #{tpu_custom_call.1} parent=5 // pred_region
        %s389 = ssub.s32 %s25, 1
        // Predicated region
        $region13: #{tpu_custom_call.1} parent=11 // pred_check
          %p390 = pneg %p93
        $region14: #{tpu_custom_call.1} parent=11 // pred_check_branch
          %392 = sbr.rel (%p390) target = $region16
        $region15: #{tpu_custom_call.1} parent=11 // pred_region
          %s394 = ssub.s32 2048, 2048
          %395 = vsyncadd [#allocation9], %s394
          %s396 = sshll.u32 [#allocation8], 4
          %s397 = int_to_ptr.vmem [resolvable:$true] %s396
          %402 = dma.hbm_to_vmem [thread:$0]  %s1, 2048, %s397, [#allocation9], 64, 64, 4
        $region16: #{tpu_custom_call.1} parent=11 // pred_fallthru
          _
        // Predicated region
        $region17: #{tpu_custom_call.1} parent=11 // pred_check
          %p403 = pneg %p270
        $region18: #{tpu_custom_call.1} parent=11 // pred_check_branch
          %405 = sbr.rel (%p403) target = $region20
        $region19: #{tpu_custom_call.1} parent=11 // pred_region
          _
        $region20: #{tpu_custom_call.1} parent=11 // pred_fallthru
          _
        // Predicated region
        $region21: #{tpu_custom_call.1} parent=11 // pred_check
          %p406 = pneg %p291
        $region22: #{tpu_custom_call.1} parent=11 // pred_check_branch
          %408 = sbr.rel (%p406) target = $region24
        $region23: #{tpu_custom_call.1} parent=11 // pred_region
          %s410 = ssub.s32 1024, 1024
          %411 = vsyncadd [#allocation9], %s410
          %s412 = sshll.u32 [#allocation15], 4
          %s413 = int_to_ptr.vmem [resolvable:$true] %s412
          %418 = dma.hbm_to_vmem [thread:$0]  %s9, 1024, %s413, [#allocation9], 64, 64, 4
        $region24: #{tpu_custom_call.1} parent=11 // pred_fallthru
          _
        // Predicated region
        $region25: #{tpu_custom_call.1} parent=11 // pred_check
          %p419 = pneg %p312
        $region26: #{tpu_custom_call.1} parent=11 // pred_check_branch
          %421 = sbr.rel (%p419) target = $region28
        $region27: #{tpu_custom_call.1} parent=11 // pred_region
          _
        $region28: #{tpu_custom_call.1} parent=11 // pred_fallthru
          _
        // Predicated region
        $region29: #{tpu_custom_call.1} parent=11 // pred_check
          %p422 = pneg %p333
        $region30: #{tpu_custom_call.1} parent=11 // pred_check_branch
          %424 = sbr.rel (%p422) target = $region32
        $region31: #{tpu_custom_call.1} parent=11 // pred_region
          %s426 = ssub.s32 1024, 1024
          %427 = vsyncadd [#allocation17], %s426
          %s428 = sshll.u32 [#allocation16], 4
          %s429 = int_to_ptr.vmem [resolvable:$true] %s428
          %434 = dma.hbm_to_vmem [thread:$0]  %s11, 1024, %s429, [#allocation17], 64, 64, 4
        $region32: #{tpu_custom_call.1} parent=11 // pred_fallthru
          _
        // Predicated region
        $region33: #{tpu_custom_call.1} parent=11 // pred_check
          %p435 = pneg %p354
        $region34: #{tpu_custom_call.1} parent=11 // pred_check_branch
          %437 = sbr.rel (%p435) target = $region36
        $region35: #{tpu_custom_call.1} parent=11 // pred_region
          _
        $region36: #{tpu_custom_call.1} parent=11 // pred_fallthru
          _
      $region12: #{tpu_custom_call.1} parent=5 // pred_fallthru
        _
      %p438 = scmp.lt.s32.totalorder %s25, 12
      // Predicated region
      $region37: #{tpu_custom_call.1} parent=5 // pred_check
        %p439 = pneg %p438
      $region38: #{tpu_custom_call.1} parent=5 // pred_check_branch
        %441 = sbr.rel (%p439) target = $region40
      $region39: #{tpu_custom_call.1} parent=5 // pred_region
        // Predicated region
        $region41: #{tpu_custom_call.1} parent=39 // pred_check
          %p442 = pneg %p66
        $region42: #{tpu_custom_call.1} parent=39 // pred_check_branch
          %444 = sbr.rel (%p442) target = $region44
        $region43: #{tpu_custom_call.1} parent=39 // pred_region
          %s445 = sand.u32 %s25, 1
          %s446 = scalar_lea.sflag [#allocation6], %s445
          %s447 = sand.u32 %s56, 1
          %s448 = smul.addr %s447, 64
          %s449 = scalar_lea.vmem [#allocation5], %s448
          %s450 = smul.u32 16, %s33
          %s452 = ssub.s32 1024, 1024
          %453 = vsyncadd %s446, %s452
          %s454 = smul.addr %s450, 2
          %s455 = sadd.s32 %s34, %s454
          %s456 = smul.addr %s455, 64
          %s457 = scalar_lea.hbm %s0, %s456
          %s458 = sshll.u32 %s449, 4
          %s459 = int_to_ptr.vmem [resolvable:$true] %s458
          %464 = dma.hbm_to_vmem [thread:$0]  %s457, 1024, %s459, %s446, 128, 64, 4
        $region44: #{tpu_custom_call.1} parent=39 // pred_fallthru
          _
        // Predicated region
        $region45: #{tpu_custom_call.1} parent=39 // pred_check
          %p465 = pneg %p113
        $region46: #{tpu_custom_call.1} parent=39 // pred_check_branch
          %467 = sbr.rel (%p465) target = $region48
        $region47: #{tpu_custom_call.1} parent=39 // pred_region
          %s468 = sand.u32 %s25, 1
          %s469 = scalar_lea.sflag [#allocation6], %s468
          %s470 = sand.u32 %s103, 1
          %s471 = smul.addr %s470, 64
          %s472 = scalar_lea.vmem [#allocation10], %s471
          %s474 = ssub.s32 1024, 1024
          %475 = vsyncadd %s469, %s474
          %s476 = smul.addr %s32, 16
          %s477 = smul.addr %s476, 64
          %s478 = scalar_lea.hbm %s2, %s477
          %s479 = sshll.u32 %s472, 4
          %s480 = int_to_ptr.vmem [resolvable:$true] %s479
          %485 = dma.hbm_to_vmem [thread:$0]  %s478, 1024, %s480, %s469, 64, 64, 4
        $region48: #{tpu_custom_call.1} parent=39 // pred_fallthru
          _
        // Predicated region
        $region49: #{tpu_custom_call.1} parent=39 // pred_check
          %p486 = pneg %p139
        $region50: #{tpu_custom_call.1} parent=39 // pred_check_branch
          %488 = sbr.rel (%p486) target = $region52
        $region51: #{tpu_custom_call.1} parent=39 // pred_region
          %s489 = sand.u32 %s25, 1
          %s490 = scalar_lea.sflag [#allocation6], %s489
          %s491 = sand.u32 %s129, 1
          %s492 = scalar_lea.vmem [#allocation11], %s491
          %s494 = ssub.s32 16, 16
          %495 = vsyncadd %s490, %s494
          %s496 = smul.addr %s32, 16
          %s497 = scalar_lea.hbm %s3, %s496
          %s499 = sshll.u32 %s492, 4
          %s500 = int_to_ptr.vmem [resolvable:$true] %s499
          %502 = dma.hbm_to_vmem [thread:$0]  %s497, 16, %s500, %s490
        $region52: #{tpu_custom_call.1} parent=39 // pred_fallthru
          _
        // Predicated region
        $region53: #{tpu_custom_call.1} parent=39 // pred_check
          %p503 = pneg %p165
        $region54: #{tpu_custom_call.1} parent=39 // pred_check_branch
          %505 = sbr.rel (%p503) target = $region56
        $region55: #{tpu_custom_call.1} parent=39 // pred_region
          %s506 = sand.u32 %s25, 1
          %s507 = scalar_lea.sflag [#allocation6], %s506
          %s508 = sand.u32 %s155, 1
          %s509 = smul.addr %s508, 64
          %s510 = scalar_lea.vmem [#allocation12], %s509
          %s512 = ssub.s32 1024, 1024
          %513 = vsyncadd %s507, %s512
          %s514 = smul.addr %s32, 16
          %s515 = smul.addr %s514, 64
          %s516 = scalar_lea.hbm %s4, %s515
          %s517 = sshll.u32 %s510, 4
          %s518 = int_to_ptr.vmem [resolvable:$true] %s517
          %523 = dma.hbm_to_vmem [thread:$0]  %s516, 1024, %s518, %s507, 64, 64, 4
        $region56: #{tpu_custom_call.1} parent=39 // pred_fallthru
          _
        // Predicated region
        $region57: #{tpu_custom_call.1} parent=39 // pred_check
          %p524 = pneg %p191
        $region58: #{tpu_custom_call.1} parent=39 // pred_check_branch
          %526 = sbr.rel (%p524) target = $region60
        $region59: #{tpu_custom_call.1} parent=39 // pred_region
          %s527 = sand.u32 %s25, 1
          %s528 = scalar_lea.sflag [#allocation6], %s527
          %s529 = sand.u32 %s181, 1
          %s530 = scalar_lea.vmem [#allocation13], %s529
          %s532 = ssub.s32 16, 16
          %533 = vsyncadd %s528, %s532
          %s534 = smul.addr %s32, 16
          %s535 = scalar_lea.hbm %s5, %s534
          %s537 = sshll.u32 %s530, 4
          %s538 = int_to_ptr.vmem [resolvable:$true] %s537
          %540 = dma.hbm_to_vmem [thread:$0]  %s535, 16, %s538, %s528
        $region60: #{tpu_custom_call.1} parent=39 // pred_fallthru
          _
        // Predicated region
        $region61: #{tpu_custom_call.1} parent=39 // pred_check
          %p541 = pneg %p217
        $region62: #{tpu_custom_call.1} parent=39 // pred_check_branch
          %543 = sbr.rel (%p541) target = $region64
        $region63: #{tpu_custom_call.1} parent=39 // pred_region
          %s544 = sand.u32 %s25, 1
          %s545 = scalar_lea.sflag [#allocation6], %s544
          %s546 = sand.u32 %s207, 1
          %s547 = smul.addr %s546, 64
          %s548 = scalar_lea.vmem [#allocation14], %s547
          %s550 = ssub.s32 1024, 1024
          %551 = vsyncadd %s545, %s550
          %s552 = smul.addr %s32, 16
          %s553 = smul.addr %s552, 64
          %s554 = scalar_lea.hbm %s6, %s553
          %s555 = sshll.u32 %s548, 4
          %s556 = int_to_ptr.vmem [resolvable:$true] %s555
          %561 = dma.hbm_to_vmem [thread:$0]  %s554, 1024, %s556, %s545, 64, 64, 4
        $region64: #{tpu_custom_call.1} parent=39 // pred_fallthru
          _
        // Predicated region
        $region65: #{tpu_custom_call.1} parent=39 // pred_check
          %p562 = pneg %p243
        $region66: #{tpu_custom_call.1} parent=39 // pred_check_branch
          %564 = sbr.rel (%p562) target = $region68
        $region67: #{tpu_custom_call.1} parent=39 // pred_region
          %p565 = scmp.lt.s32.totalorder %s33, 1
          %s566 = scalar_select %p565, %s33, 1
          %s567 = smul.addr %s566, 4
          %s568 = scalar_lea.vmem %s7, %s567
        $region68: #{tpu_custom_call.1} parent=39 // pred_fallthru
          _
      $region40: #{tpu_custom_call.1} parent=5 // pred_fallthru
        _
      %p569 = scmp.le.s32.totalorder 1, %s25
      %p570 = scmp.lt.s32.totalorder %s25, 13
      %p571 = pnand %p569, %p570
      %p572 = pneg %p571
      // Predicated region
      $region69: #{tpu_custom_call.1} parent=5 // pred_check
        _
      $region70: #{tpu_custom_call.1} parent=5 // pred_check_branch
        %574 = sbr.rel (%p571) target = $region72
      $region71: #{tpu_custom_call.1} parent=5 // pred_region
        %s575 = ssub.s32 %s25, 1
        %s576 = sand.u32 %s30, 1
        %s577 = scalar_lea.sflag [#allocation6], %s576
        %s578 = sand.u32 %s59, 1
        %s579 = smul.addr %s578, 64
        %s580 = scalar_lea.vmem [#allocation5], %s579
        // Predicated region
        $region73: #{tpu_custom_call.1} parent=71 // pred_check
          %p581 = pneg %p72
        $region74: #{tpu_custom_call.1} parent=71 // pred_check_branch
          %583 = sbr.rel (%p581) target = $region76
        $region75: #{tpu_custom_call.1} parent=71 // pred_region
          %584 = dma.done %s577, 1024
        $region76: #{tpu_custom_call.1} parent=71 // pred_fallthru
          _
        // Predicated region
        $region77: #{tpu_custom_call.1} parent=71 // pred_check
          %p585 = pneg %p93
        $region78: #{tpu_custom_call.1} parent=71 // pred_check_branch
          %587 = sbr.rel (%p585) target = $region80
        $region79: #{tpu_custom_call.1} parent=71 // pred_region
          %588 = dma.done [#allocation9], 2048
        $region80: #{tpu_custom_call.1} parent=71 // pred_fallthru
          _
        %s589 = sand.u32 %s30, 1
        %s590 = scalar_lea.sflag [#allocation6], %s589
        %s591 = sand.u32 %s106, 1
        %s592 = smul.addr %s591, 64
        %s593 = scalar_lea.vmem [#allocation10], %s592
        // Predicated region
        $region81: #{tpu_custom_call.1} parent=71 // pred_check
          %p594 = pneg %p119
        $region82: #{tpu_custom_call.1} parent=71 // pred_check_branch
          %596 = sbr.rel (%p594) target = $region84
        $region83: #{tpu_custom_call.1} parent=71 // pred_region
          %597 = dma.done %s590, 1024
        $region84: #{tpu_custom_call.1} parent=71 // pred_fallthru
          _
        %s598 = sand.u32 %s30, 1
        %s599 = scalar_lea.sflag [#allocation6], %s598
        %s600 = sand.u32 %s132, 1
        %s601 = scalar_lea.vmem [#allocation11], %s600
        // Predicated region
        $region85: #{tpu_custom_call.1} parent=71 // pred_check
          %p602 = pneg %p145
        $region86: #{tpu_custom_call.1} parent=71 // pred_check_branch
          %604 = sbr.rel (%p602) target = $region88
        $region87: #{tpu_custom_call.1} parent=71 // pred_region
          %605 = dma.done %s599, 16
        $region88: #{tpu_custom_call.1} parent=71 // pred_fallthru
          _
        %s606 = sand.u32 %s30, 1
        %s607 = scalar_lea.sflag [#allocation6], %s606
        %s608 = sand.u32 %s158, 1
        %s609 = smul.addr %s608, 64
        %s610 = scalar_lea.vmem [#allocation12], %s609
        // Predicated region
        $region89: #{tpu_custom_call.1} parent=71 // pred_check
          %p611 = pneg %p171
        $region90: #{tpu_custom_call.1} parent=71 // pred_check_branch
          %613 = sbr.rel (%p611) target = $region92
        $region91: #{tpu_custom_call.1} parent=71 // pred_region
          %614 = dma.done %s607, 1024
        $region92: #{tpu_custom_call.1} parent=71 // pred_fallthru
          _
        %s615 = sand.u32 %s30, 1
        %s616 = scalar_lea.sflag [#allocation6], %s615
        %s617 = sand.u32 %s184, 1
        %s618 = scalar_lea.vmem [#allocation13], %s617
        // Predicated region
        $region93: #{tpu_custom_call.1} parent=71 // pred_check
          %p619 = pneg %p197
        $region94: #{tpu_custom_call.1} parent=71 // pred_check_branch
          %621 = sbr.rel (%p619) target = $region96
        $region95: #{tpu_custom_call.1} parent=71 // pred_region
          %622 = dma.done %s616, 16
        $region96: #{tpu_custom_call.1} parent=71 // pred_fallthru
          _
        %s623 = sand.u32 %s30, 1
        %s624 = scalar_lea.sflag [#allocation6], %s623
        %s625 = sand.u32 %s210, 1
        %s626 = smul.addr %s625, 64
        %s627 = scalar_lea.vmem [#allocation14], %s626
        // Predicated region
        $region97: #{tpu_custom_call.1} parent=71 // pred_check
          %p628 = pneg %p223
        $region98: #{tpu_custom_call.1} parent=71 // pred_check_branch
          %630 = sbr.rel (%p628) target = $region100
        $region99: #{tpu_custom_call.1} parent=71 // pred_region
          %631 = dma.done %s624, 1024
        $region100: #{tpu_custom_call.1} parent=71 // pred_fallthru
          _
        // Predicated region
        $region101: #{tpu_custom_call.1} parent=71 // pred_check
          %p632 = pneg %p291
        $region102: #{tpu_custom_call.1} parent=71 // pred_check_branch
          %634 = sbr.rel (%p632) target = $region104
        $region103: #{tpu_custom_call.1} parent=71 // pred_region
          %635 = dma.done [#allocation9], 1024
        $region104: #{tpu_custom_call.1} parent=71 // pred_fallthru
          _
        // Predicated region
        $region105: #{tpu_custom_call.1} parent=71 // pred_check
          %p636 = pneg %p333
        $region106: #{tpu_custom_call.1} parent=71 // pred_check_branch
          %638 = sbr.rel (%p636) target = $region108
        $region107: #{tpu_custom_call.1} parent=71 // pred_region
          %639 = dma.done [#allocation17], 1024
        $region108: #{tpu_custom_call.1} parent=71 // pred_fallthru
          _
        %s640 = sand.u32 %s30, 1
        %s641 = scalar_lea.sflag [#allocation6], %s640
        %s642 = sand.u32 %s59, 1
        %s643 = smul.addr %s642, 64
        %s644 = scalar_lea.vmem [#allocation5], %s643
        %p645 = pneg %p72
        %p646 = pneg %p69
        %p647 = pneg %p93
        %p648 = pneg %p90
        %s649 = sand.u32 %s30, 1
        %s650 = scalar_lea.sflag [#allocation6], %s649
        %s651 = sand.u32 %s106, 1
        %s652 = smul.addr %s651, 64
        %s653 = scalar_lea.vmem [#allocation10], %s652
        %p654 = pneg %p119
        %p655 = pneg %p116
        %s656 = sand.u32 %s30, 1
        %s657 = scalar_lea.sflag [#allocation6], %s656
        %s658 = sand.u32 %s132, 1
        %s659 = scalar_lea.vmem [#allocation11], %s658
        %p660 = pneg %p145
        %p661 = pneg %p142
        %s662 = sand.u32 %s30, 1
        %s663 = scalar_lea.sflag [#allocation6], %s662
        %s664 = sand.u32 %s158, 1
        %s665 = smul.addr %s664, 64
        %s666 = scalar_lea.vmem [#allocation12], %s665
        %p667 = pneg %p171
        %p668 = pneg %p168
        %s669 = sand.u32 %s30, 1
        %s670 = scalar_lea.sflag [#allocation6], %s669
        %s671 = sand.u32 %s184, 1
        %s672 = scalar_lea.vmem [#allocation13], %s671
        %p673 = pneg %p197
        %p674 = pneg %p194
        %s675 = sand.u32 %s30, 1
        %s676 = scalar_lea.sflag [#allocation6], %s675
        %s677 = sand.u32 %s210, 1
        %s678 = smul.addr %s677, 64
        %s679 = scalar_lea.vmem [#allocation14], %s678
        %p680 = pneg %p223
        %p681 = pneg %p220
        %p682 = scmp.lt.s32.totalorder %s36, 1
        %s683 = scalar_select %p682, %s36, 1
        %s684 = smul.addr %s683, 4
        %s685 = scalar_lea.vmem %s7, %s684
        %p686 = pneg %p249
        %p687 = pneg %p246
        %p688 = pneg %p270
        %p689 = pneg %p267
        %p690 = pneg %p291
        %p691 = pneg %p288
        %p692 = pneg %p312
        %p693 = pneg %p309
        %p694 = pneg %p333
        %p695 = pneg %p330
        %p696 = pneg %p354
        %p697 = pneg %p351
        %p698 = pneg %p375
        %p699 = pneg %p372
        %s700 = smul.u32 16, %s36
        %p701 = scmp.lt.s32.totalorder %s36, 1
        %s702 = scalar_select %p701, %s36, 1
        %s703 = smul.addr %s702, 4
        %s704 = scalar_lea.vmem %s7, %s703
        %p706 = scmp.eq.s32.totalorder %s35, 0
        %p707 = scmp.eq.s32.totalorder %s36, 0
        %p708 = pnand %p706, %p707
        %p709 = pneg %p708
        %p710 = scmp.eq.s32.totalorder %s37, 0
        %p711 = pnand %p709, %p710
        %p712 = pneg %p711
        // Predicated region
        $region109: #{tpu_custom_call.1} parent=71 // pred_check
          _
        $region110: #{tpu_custom_call.1} parent=71 // pred_check_branch
          %714 = sbr.rel (%p711) target = $region112
        $region111: #{tpu_custom_call.1} parent=71 // pred_region
          %v715 = vld [vmem:[#allocation8] sm:$0xf]
          %v716 = vld [vmem:[#allocation8 + $0x4] sm:$0xf]
          %v717 = vld [vmem:[#allocation8 + $0x8] sm:$0xf]
          %v718 = vld [vmem:[#allocation8 + $0xc] sm:$0xf]
          %v719 = vld [vmem:[#allocation8 + $0x10] sm:$0xf]
          %v720 = vld [vmem:[#allocation8 + $0x14] sm:$0xf]
          %v721 = vld [vmem:[#allocation8 + $0x18] sm:$0xf]
          %v722 = vld [vmem:[#allocation8 + $0x1c] sm:$0xf]
          %v723 = vld [vmem:[#allocation8 + $0x20] sm:$0xf]
          %v724 = vld [vmem:[#allocation8 + $0x24] sm:$0xf]
          %v725 = vld [vmem:[#allocation8 + $0x28] sm:$0xf]
          %v726 = vld [vmem:[#allocation8 + $0x2c] sm:$0xf]
          %v727 = vld [vmem:[#allocation8 + $0x30] sm:$0xf]
          %v728 = vld [vmem:[#allocation8 + $0x34] sm:$0xf]
          %v729 = vld [vmem:[#allocation8 + $0x38] sm:$0xf]
          %v730 = vld [vmem:[#allocation8 + $0x3c] sm:$0xf]
          %v731 = vld [vmem:[#allocation8 + $0x40] sm:$0xf]
          %v732 = vld [vmem:[#allocation8 + $0x44] sm:$0xf]
          %v733 = vld [vmem:[#allocation8 + $0x48] sm:$0xf]
          %v734 = vld [vmem:[#allocation8 + $0x4c] sm:$0xf]
          %v735 = vld [vmem:[#allocation8 + $0x50] sm:$0xf]
          %v736 = vld [vmem:[#allocation8 + $0x54] sm:$0xf]
          %v737 = vld [vmem:[#allocation8 + $0x58] sm:$0xf]
          %v738 = vld [vmem:[#allocation8 + $0x5c] sm:$0xf]
          %v739 = vld [vmem:[#allocation8 + $0x60] sm:$0xf]
          %v740 = vld [vmem:[#allocation8 + $0x64] sm:$0xf]
          %v741 = vld [vmem:[#allocation8 + $0x68] sm:$0xf]
          %v742 = vld [vmem:[#allocation8 + $0x6c] sm:$0xf]
          %v743 = vld [vmem:[#allocation8 + $0x70] sm:$0xf]
          %v744 = vld [vmem:[#allocation8 + $0x74] sm:$0xf]
          %v745 = vld [vmem:[#allocation8 + $0x78] sm:$0xf]
          %v746 = vld [vmem:[#allocation8 + $0x7c] sm:$0xf]
          %v779 = vunpack.c.l.b16 %v715
          %v780 = vunpack.c.l.b16 %v716
          %v781 = vunpack.c.l.b16 %v717
          %v782 = vunpack.c.l.b16 %v718
          %v783 = vunpack.c.l.b16 %v719
          %v784 = vunpack.c.l.b16 %v720
          %v785 = vunpack.c.l.b16 %v721
          %v786 = vunpack.c.l.b16 %v722
          %v787 = vunpack.c.l.b16 %v723
          %v788 = vunpack.c.l.b16 %v724
          %v789 = vunpack.c.l.b16 %v725
          %v790 = vunpack.c.l.b16 %v726
          %v791 = vunpack.c.l.b16 %v727
          %v792 = vunpack.c.l.b16 %v728
          %v793 = vunpack.c.l.b16 %v729
          %v794 = vunpack.c.l.b16 %v730
          %v795 = vunpack.c.l.b16 %v731
          %v796 = vunpack.c.l.b16 %v732
          %v797 = vunpack.c.l.b16 %v733
          %v798 = vunpack.c.l.b16 %v734
          %v799 = vunpack.c.l.b16 %v735
          %v800 = vunpack.c.l.b16 %v736
          %v801 = vunpack.c.l.b16 %v737
          %v802 = vunpack.c.l.b16 %v738
          %v803 = vunpack.c.l.b16 %v739
          %v804 = vunpack.c.l.b16 %v740
          %v805 = vunpack.c.l.b16 %v741
          %v806 = vunpack.c.l.b16 %v742
          %v807 = vunpack.c.l.b16 %v743
          %v808 = vunpack.c.l.b16 %v744
          %v809 = vunpack.c.l.b16 %v745
          %v810 = vunpack.c.l.b16 %v746
          %v811 = vpack.c.b16 %v780, %v779
          %v812 = vpack.c.b16 %v782, %v781
          %v813 = vpack.c.b16 %v784, %v783
          %v814 = vpack.c.b16 %v786, %v785
          %v815 = vpack.c.b16 %v788, %v787
          %v816 = vpack.c.b16 %v790, %v789
          %v817 = vpack.c.b16 %v792, %v791
          %v818 = vpack.c.b16 %v794, %v793
          %v819 = vpack.c.b16 %v796, %v795
          %v820 = vpack.c.b16 %v798, %v797
          %v821 = vpack.c.b16 %v800, %v799
          %v822 = vpack.c.b16 %v802, %v801
          %v823 = vpack.c.b16 %v804, %v803
          %v824 = vpack.c.b16 %v806, %v805
          %v825 = vpack.c.b16 %v808, %v807
          %v826 = vpack.c.b16 %v810, %v809
          %843 = vst [vmem:[#allocation2] sm:$0xff] %v811
          %844 = vst [vmem:[#allocation2 + $0x8] sm:$0xff] %v812
          %845 = vst [vmem:[#allocation2 + $0x10] sm:$0xff] %v813
          %846 = vst [vmem:[#allocation2 + $0x18] sm:$0xff] %v814
          %847 = vst [vmem:[#allocation2 + $0x20] sm:$0xff] %v815
          %848 = vst [vmem:[#allocation2 + $0x28] sm:$0xff] %v816
          %849 = vst [vmem:[#allocation2 + $0x30] sm:$0xff] %v817
          %850 = vst [vmem:[#allocation2 + $0x38] sm:$0xff] %v818
          %851 = vst [vmem:[#allocation2 + $0x40] sm:$0xff] %v819
          %852 = vst [vmem:[#allocation2 + $0x48] sm:$0xff] %v820
          %853 = vst [vmem:[#allocation2 + $0x50] sm:$0xff] %v821
          %854 = vst [vmem:[#allocation2 + $0x58] sm:$0xff] %v822
          %855 = vst [vmem:[#allocation2 + $0x60] sm:$0xff] %v823
          %856 = vst [vmem:[#allocation2 + $0x68] sm:$0xff] %v824
          %857 = vst [vmem:[#allocation2 + $0x70] sm:$0xff] %v825
          %858 = vst [vmem:[#allocation2 + $0x78] sm:$0xff] %v826
          %859 = vst [vmem:[#allocation4] sm:$0xff] 0.0
        $region112: #{tpu_custom_call.1} parent=71 // pred_fallthru
          _
        // Predicated region
        $region113: #{tpu_custom_call.1} parent=71 // pred_check
          %p860 = pneg %p710
        $region114: #{tpu_custom_call.1} parent=71 // pred_check_branch
          %862 = sbr.rel (%p860) target = $region116
        $region115: #{tpu_custom_call.1} parent=71 // pred_region
          %863 = vst [vmem:[#allocation3] sm:$0xff] 0.0
          %864 = vst [vmem:[#allocation3 + $0x8] sm:$0xff] 0.0
          %865 = vst [vmem:[#allocation3 + $0x10] sm:$0xff] 0.0
          %866 = vst [vmem:[#allocation3 + $0x18] sm:$0xff] 0.0
          %867 = vst [vmem:[#allocation3 + $0x20] sm:$0xff] 0.0
          %868 = vst [vmem:[#allocation3 + $0x28] sm:$0xff] 0.0
          %869 = vst [vmem:[#allocation3 + $0x30] sm:$0xff] 0.0
          %870 = vst [vmem:[#allocation3 + $0x38] sm:$0xff] 0.0
          %871 = vst [vmem:[#allocation3 + $0x40] sm:$0xff] 0.0
          %872 = vst [vmem:[#allocation3 + $0x48] sm:$0xff] 0.0
          %873 = vst [vmem:[#allocation3 + $0x50] sm:$0xff] 0.0
          %874 = vst [vmem:[#allocation3 + $0x58] sm:$0xff] 0.0
          %875 = vst [vmem:[#allocation3 + $0x60] sm:$0xff] 0.0
          %876 = vst [vmem:[#allocation3 + $0x68] sm:$0xff] 0.0
          %877 = vst [vmem:[#allocation3 + $0x70] sm:$0xff] 0.0
          %878 = vst [vmem:[#allocation3 + $0x78] sm:$0xff] 0.0
        $region116: #{tpu_custom_call.1} parent=71 // pred_fallthru
          _
        %s879 = smul.u32 %s37, 128
        %s880 = smul.u32 %s36, 128
        %v881 = vld [vmem:[#allocation3] sm:$0xff]
        %v882 = vld [vmem:[#allocation3 + $0x8] sm:$0xff]
        %v883 = vld [vmem:[#allocation3 + $0x10] sm:$0xff]
        %v884 = vld [vmem:[#allocation3 + $0x18] sm:$0xff]
        %v885 = vld [vmem:[#allocation3 + $0x20] sm:$0xff]
        %v886 = vld [vmem:[#allocation3 + $0x28] sm:$0xff]
        %v887 = vld [vmem:[#allocation3 + $0x30] sm:$0xff]
        %v888 = vld [vmem:[#allocation3 + $0x38] sm:$0xff]
        %v889 = vld [vmem:[#allocation3 + $0x40] sm:$0xff]
        %v890 = vld [vmem:[#allocation3 + $0x48] sm:$0xff]
        %v891 = vld [vmem:[#allocation3 + $0x50] sm:$0xff]
        %v892 = vld [vmem:[#allocation3 + $0x58] sm:$0xff]
        %v893 = vld [vmem:[#allocation3 + $0x60] sm:$0xff]
        %v894 = vld [vmem:[#allocation3 + $0x68] sm:$0xff]
        %v895 = vld [vmem:[#allocation3 + $0x70] sm:$0xff]
        %v896 = vld [vmem:[#allocation3 + $0x78] sm:$0xff]
        %v897 = vld [vmem:[%s580] sm:$0xf]
        %v898 = vld [vmem:[%s580 + $0x4] sm:$0xf]
        %v899 = vld [vmem:[%s580 + $0x8] sm:$0xf]
        %v900 = vld [vmem:[%s580 + $0xc] sm:$0xf]
        %v901 = vld [vmem:[%s580 + $0x10] sm:$0xf]
        %v902 = vld [vmem:[%s580 + $0x14] sm:$0xf]
        %v903 = vld [vmem:[%s580 + $0x18] sm:$0xf]
        %v904 = vld [vmem:[%s580 + $0x1c] sm:$0xf]
        %v905 = vld [vmem:[%s580 + $0x20] sm:$0xf]
        %v906 = vld [vmem:[%s580 + $0x24] sm:$0xf]
        %v907 = vld [vmem:[%s580 + $0x28] sm:$0xf]
        %v908 = vld [vmem:[%s580 + $0x2c] sm:$0xf]
        %v909 = vld [vmem:[%s580 + $0x30] sm:$0xf]
        %v910 = vld [vmem:[%s580 + $0x34] sm:$0xf]
        %v911 = vld [vmem:[%s580 + $0x38] sm:$0xf]
        %v912 = vld [vmem:[%s580 + $0x3c] sm:$0xf]
        %s913 = sshra.s32 %s879, 4
        %s914 = sand.u32 %s879, 15
        %s915 = smul.addr %s913, 8
        %s916 = scalar_lea.vmem [#allocation2], %s915
        %v917 = vld [vmem:[%s916] sm:$0xff]
        %v918 = vld [vmem:[%s916 + $0x8] sm:$0xff]
        %v919 = vld [vmem:[%s916 + $0x10] sm:$0xff]
        %v920 = vld [vmem:[%s916 + $0x18] sm:$0xff]
        %v921 = vld [vmem:[%s916 + $0x20] sm:$0xff]
        %v922 = vld [vmem:[%s916 + $0x28] sm:$0xff]
        %v923 = vld [vmem:[%s916 + $0x30] sm:$0xff]
        %v924 = vld [vmem:[%s916 + $0x38] sm:$0xff]
        %v941 = vunpack.c.l.b16 %v897
        %v942 = vunpack.c.l.b16 %v898
        %v943 = vunpack.c.l.b16 %v899
        %v944 = vunpack.c.l.b16 %v900
        %v945 = vunpack.c.l.b16 %v901
        %v946 = vunpack.c.l.b16 %v902
        %v947 = vunpack.c.l.b16 %v903
        %v948 = vunpack.c.l.b16 %v904
        %v949 = vunpack.c.l.b16 %v905
        %v950 = vunpack.c.l.b16 %v906
        %v951 = vunpack.c.l.b16 %v907
        %v952 = vunpack.c.l.b16 %v908
        %v953 = vunpack.c.l.b16 %v909
        %v954 = vunpack.c.l.b16 %v910
        %v955 = vunpack.c.l.b16 %v911
        %v956 = vunpack.c.l.b16 %v912
        %v957 = vpack.c.b16 %v942, %v941
        %v958 = vpack.c.b16 %v944, %v943
        %v959 = vpack.c.b16 %v946, %v945
        %v960 = vpack.c.b16 %v948, %v947
        %v961 = vpack.c.b16 %v950, %v949
        %v962 = vpack.c.b16 %v952, %v951
        %v963 = vpack.c.b16 %v954, %v953
        %v964 = vpack.c.b16 %v956, %v955
        %973 = vmatprep.subr.bf16.mxu0 0
        %974 = vmatpush1.bf16.msra.mxu0 %v917
        %975 = vmatprep.subr.bf16.mxu0 0
        %976 = vmatpush1.bf16.msra.mxu0 %v918
        %977 = vmatprep.subr.bf16.mxu0 0
        %978 = vmatpush1.bf16.msra.mxu0 %v919
        %979 = vmatprep.subr.bf16.mxu0 0
        %980 = vmatpush1.bf16.msra.mxu0 %v920
        %981 = vmatprep.subr.bf16.mxu0 0
        %982 = vmatpush1.bf16.msra.mxu0 %v921
        %983 = vmatprep.subr.bf16.mxu0 0
        %984 = vmatpush1.bf16.msra.mxu0 %v922
        %985 = vmatprep.subr.bf16.mxu0 0
        %986 = vmatpush1.bf16.msra.mxu0 %v923
        %987 = vmatprep.subr.bf16.mxu0 0
        %988 = vmatpush1.bf16.msra.mxu0 %v924
        %989 = vmatprep.subr.bf16.mxu0 0
        %990 = vmatpush1.bf16.msra.mxu0 0
        %991 = vmatprep.subr.bf16.mxu0 0
        %992 = vmatpush1.bf16.msra.mxu0 0
        %993 = vmatprep.subr.bf16.mxu0 0
        %994 = vmatpush1.bf16.msra.mxu0 0
        %995 = vmatprep.subr.bf16.mxu0 0
        %996 = vmatpush1.bf16.msra.mxu0 0
        %997 = vmatprep.subr.bf16.mxu0 0
        %998 = vmatpush1.bf16.msra.mxu0 0
        %999 = vmatprep.subr.bf16.mxu0 0
        %1000 = vmatpush1.bf16.msra.mxu0 0
        %1001 = vmatprep.subr.bf16.mxu0 0
        %1002 = vmatpush1.bf16.msra.mxu0 0
        %1003 = vmatprep.subr.bf16.mxu0 0
        %1004 = vmatpush1.bf16.msra.mxu0 0
        %1005 = vmatprep.mubr.bf16.mxu0 0
        %1006 = vmatmul.mubr.bf16.gmra.mrb[0].mxu0 %v957
        %v1007 = vpop.f32.mrb[0].mxu0
        %v1008 = vadd.f32 0.0, %v1007
        %v1009 = vpop.f32.mrb[0].mxu0
        %v1010 = vpop.f32.mrb[0].mxu0
        %v1011 = vadd.f32 0.0, %v1010
        %v1012 = vpop.f32.mrb[0].mxu0
        %1013 = vmatprep.mubr.bf16.mxu0 0
        %1014 = vmatmul.mubr.bf16.gmra.mrb[0].mxu0 %v958
        %v1015 = vpop.f32.mrb[0].mxu0
        %v1016 = vadd.f32 0.0, %v1015
        %v1017 = vpop.f32.mrb[0].mxu0
        %v1018 = vpop.f32.mrb[0].mxu0
        %v1019 = vadd.f32 0.0, %v1018
        %v1020 = vpop.f32.mrb[0].mxu0
        %1021 = vmatprep.mubr.bf16.mxu0 0
        %1022 = vmatmul.mubr.bf16.gmra.mrb[0].mxu0 %v959
        %v1023 = vpop.f32.mrb[0].mxu0
        %v1024 = vadd.f32 0.0, %v1023
        %v1025 = vpop.f32.mrb[0].mxu0
        %v1026 = vpop.f32.mrb[0].mxu0
        %v1027 = vadd.f32 0.0, %v1026
        %v1028 = vpop.f32.mrb[0].mxu0
        %1029 = vmatprep.mubr.bf16.mxu0 0
        %1030 = vmatmul.mubr.bf16.gmra.mrb[0].mxu0 %v960
        %v1031 = vpop.f32.mrb[0].mxu0
        %v1032 = vadd.f32 0.0, %v1031
        %v1033 = vpop.f32.mrb[0].mxu0
        %v1034 = vpop.f32.mrb[0].mxu0
        %v1035 = vadd.f32 0.0, %v1034
        %v1036 = vpop.f32.mrb[0].mxu0
        %1037 = vmatprep.mubr.bf16.mxu0 0
        %1038 = vmatmul.mubr.bf16.gmra.mrb[0].mxu0 %v961
        %v1039 = vpop.f32.mrb[0].mxu0
        %v1040 = vadd.f32 0.0, %v1039
        %v1041 = vpop.f32.mrb[0].mxu0
        %v1042 = vpop.f32.mrb[0].mxu0
        %v1043 = vadd.f32 0.0, %v1042
        %v1044 = vpop.f32.mrb[0].mxu0
        %1045 = vmatprep.mubr.bf16.mxu0 0
        %1046 = vmatmul.mubr.bf16.gmra.mrb[0].mxu0 %v962
        %v1047 = vpop.f32.mrb[0].mxu0
        %v1048 = vadd.f32 0.0, %v1047
        %v1049 = vpop.f32.mrb[0].mxu0
        %v1050 = vpop.f32.mrb[0].mxu0
        %v1051 = vadd.f32 0.0, %v1050
        %v1052 = vpop.f32.mrb[0].mxu0
        %1053 = vmatprep.mubr.bf16.mxu0 0
        %1054 = vmatmul.mubr.bf16.gmra.mrb[0].mxu0 %v963
        %v1055 = vpop.f32.mrb[0].mxu0
        %v1056 = vadd.f32 0.0, %v1055
        %v1057 = vpop.f32.mrb[0].mxu0
        %v1058 = vpop.f32.mrb[0].mxu0
        %v1059 = vadd.f32 0.0, %v1058
        %v1060 = vpop.f32.mrb[0].mxu0
        %1061 = vmatprep.mubr.bf16.mxu0 0
        %1062 = vmatmul.mubr.bf16.gmra.mrb[0].mxu0 %v964
        %v1063 = vpop.f32.mrb[0].mxu0
        %v1064 = vadd.f32 0.0, %v1063
        %v1065 = vpop.f32.mrb[0].mxu0
        %v1066 = vpop.f32.mrb[0].mxu0
        %v1067 = vadd.f32 0.0, %v1066
        %v1068 = vpop.f32.mrb[0].mxu0
        %1069 = vdwg.mxu0
        %v1070 = vadd.f32 %v881, %v1008
        %v1071 = vadd.f32 %v882, %v1011
        %v1072 = vadd.f32 %v883, %v1016
        %v1073 = vadd.f32 %v884, %v1019
        %v1074 = vadd.f32 %v885, %v1024
        %v1075 = vadd.f32 %v886, %v1027
        %v1076 = vadd.f32 %v887, %v1032
        %v1077 = vadd.f32 %v888, %v1035
        %v1078 = vadd.f32 %v889, %v1040
        %v1079 = vadd.f32 %v890, %v1043
        %v1080 = vadd.f32 %v891, %v1048
        %v1081 = vadd.f32 %v892, %v1051
        %v1082 = vadd.f32 %v893, %v1056
        %v1083 = vadd.f32 %v894, %v1059
        %v1084 = vadd.f32 %v895, %v1064
        %v1085 = vadd.f32 %v896, %v1067
        %1086 = vst [vmem:[#allocation3] sm:$0xff] %v1070
        %1087 = vst [vmem:[#allocation3 + $0x8] sm:$0xff] %v1071
        %1088 = vst [vmem:[#allocation3 + $0x10] sm:$0xff] %v1072
        %1089 = vst [vmem:[#allocation3 + $0x18] sm:$0xff] %v1073
        %1090 = vst [vmem:[#allocation3 + $0x20] sm:$0xff] %v1074
        %1091 = vst [vmem:[#allocation3 + $0x28] sm:$0xff] %v1075
        %1092 = vst [vmem:[#allocation3 + $0x30] sm:$0xff] %v1076
        %1093 = vst [vmem:[#allocation3 + $0x38] sm:$0xff] %v1077
        %1094 = vst [vmem:[#allocation3 + $0x40] sm:$0xff] %v1078
        %1095 = vst [vmem:[#allocation3 + $0x48] sm:$0xff] %v1079
        %1096 = vst [vmem:[#allocation3 + $0x50] sm:$0xff] %v1080
        %1097 = vst [vmem:[#allocation3 + $0x58] sm:$0xff] %v1081
        %1098 = vst [vmem:[#allocation3 + $0x60] sm:$0xff] %v1082
        %1099 = vst [vmem:[#allocation3 + $0x68] sm:$0xff] %v1083
        %1100 = vst [vmem:[#allocation3 + $0x70] sm:$0xff] %v1084
        %1101 = vst [vmem:[#allocation3 + $0x78] sm:$0xff] %v1085
        %p1102 = scmp.eq.s32.totalorder %s37, 1
        // Predicated region
        $region117: #{tpu_custom_call.1} parent=71 // pred_check
          %p1103 = pneg %p1102
        $region118: #{tpu_custom_call.1} parent=71 // pred_check_branch
          %1105 = sbr.rel (%p1103) target = $region120
        $region119: #{tpu_custom_call.1} parent=71 // pred_region
          %s1106 = sshra.s32 %s880, 4
          %s1107 = sand.u32 %s880, 15
          %s1108 = smul.addr %s1106, 8
          %s1109 = scalar_lea.vmem [#allocation2], %s1108
          %v1110 = vld [vmem:[%s1109] sm:$0xff]
          %v1111 = vld [vmem:[%s1109 + $0x8] sm:$0xff]
          %v1112 = vld [vmem:[%s1109 + $0x10] sm:$0xff]
          %v1113 = vld [vmem:[%s1109 + $0x18] sm:$0xff]
          %v1114 = vld [vmem:[%s1109 + $0x20] sm:$0xff]
          %v1115 = vld [vmem:[%s1109 + $0x28] sm:$0xff]
          %v1116 = vld [vmem:[%s1109 + $0x30] sm:$0xff]
          %v1117 = vld [vmem:[%s1109 + $0x38] sm:$0xff]
          %v1118 = vunpack.c.l.bf16 %v1110
          %v1119 = vunpack.c.h.bf16 %v1110
          %v1120 = vunpack.c.l.bf16 %v1111
          %v1121 = vunpack.c.h.bf16 %v1111
          %v1122 = vunpack.c.l.bf16 %v1112
          %v1123 = vunpack.c.h.bf16 %v1112
          %v1124 = vunpack.c.l.bf16 %v1113
          %v1125 = vunpack.c.h.bf16 %v1113
          %v1126 = vunpack.c.l.bf16 %v1114
          %v1127 = vunpack.c.h.bf16 %v1114
          %v1128 = vunpack.c.l.bf16 %v1115
          %v1129 = vunpack.c.h.bf16 %v1115
          %v1130 = vunpack.c.l.bf16 %v1116
          %v1131 = vunpack.c.h.bf16 %v1116
          %v1132 = vunpack.c.l.bf16 %v1117
          %v1133 = vunpack.c.h.bf16 %v1117
          %v1134 = vld [vmem:[#allocation3] sm:$0xff]
          %v1135 = vld [vmem:[#allocation3 + $0x8] sm:$0xff]
          %v1136 = vld [vmem:[#allocation3 + $0x10] sm:$0xff]
          %v1137 = vld [vmem:[#allocation3 + $0x18] sm:$0xff]
          %v1138 = vld [vmem:[#allocation3 + $0x20] sm:$0xff]
          %v1139 = vld [vmem:[#allocation3 + $0x28] sm:$0xff]
          %v1140 = vld [vmem:[#allocation3 + $0x30] sm:$0xff]
          %v1141 = vld [vmem:[#allocation3 + $0x38] sm:$0xff]
          %v1142 = vld [vmem:[#allocation3 + $0x40] sm:$0xff]
          %v1143 = vld [vmem:[#allocation3 + $0x48] sm:$0xff]
          %v1144 = vld [vmem:[#allocation3 + $0x50] sm:$0xff]
          %v1145 = vld [vmem:[#allocation3 + $0x58] sm:$0xff]
          %v1146 = vld [vmem:[#allocation3 + $0x60] sm:$0xff]
          %v1147 = vld [vmem:[#allocation3 + $0x68] sm:$0xff]
          %v1148 = vld [vmem:[#allocation3 + $0x70] sm:$0xff]
          %v1149 = vld [vmem:[#allocation3 + $0x78] sm:$0xff]
          %v1150 = vadd.f32 %v1118, %v1134
          %v1151 = vadd.f32 %v1119, %v1135
          %v1152 = vadd.f32 %v1120, %v1136
          %v1153 = vadd.f32 %v1121, %v1137
          %v1154 = vadd.f32 %v1122, %v1138
          %v1155 = vadd.f32 %v1123, %v1139
          %v1156 = vadd.f32 %v1124, %v1140
          %v1157 = vadd.f32 %v1125, %v1141
          %v1158 = vadd.f32 %v1126, %v1142
          %v1159 = vadd.f32 %v1127, %v1143
          %v1160 = vadd.f32 %v1128, %v1144
          %v1161 = vadd.f32 %v1129, %v1145
          %v1162 = vadd.f32 %v1130, %v1146
          %v1163 = vadd.f32 %v1131, %v1147
          %v1164 = vadd.f32 %v1132, %v1148
          %v1165 = vadd.f32 %v1133, %v1149
          %v1166 = vpack.c.bf16 %v1151, %v1150
          %v1167 = vpack.c.bf16 %v1153, %v1152
          %v1168 = vpack.c.bf16 %v1155, %v1154
          %v1169 = vpack.c.bf16 %v1157, %v1156
          %v1170 = vpack.c.bf16 %v1159, %v1158
          %v1171 = vpack.c.bf16 %v1161, %v1160
          %v1172 = vpack.c.bf16 %v1163, %v1162
          %v1173 = vpack.c.bf16 %v1165, %v1164
          %v1174 = vld [vmem:[%s593] sm:$0xf]
          %v1175 = vld [vmem:[%s593 + $0x4] sm:$0xf]
          %v1176 = vld [vmem:[%s593 + $0x8] sm:$0xf]
          %v1177 = vld [vmem:[%s593 + $0xc] sm:$0xf]
          %v1178 = vld [vmem:[%s593 + $0x10] sm:$0xf]
          %v1179 = vld [vmem:[%s593 + $0x14] sm:$0xf]
          %v1180 = vld [vmem:[%s593 + $0x18] sm:$0xf]
          %v1181 = vld [vmem:[%s593 + $0x1c] sm:$0xf]
          %v1182 = vld [vmem:[%s593 + $0x20] sm:$0xf]
          %v1183 = vld [vmem:[%s593 + $0x24] sm:$0xf]
          %v1184 = vld [vmem:[%s593 + $0x28] sm:$0xf]
          %v1185 = vld [vmem:[%s593 + $0x2c] sm:$0xf]
          %v1186 = vld [vmem:[%s593 + $0x30] sm:$0xf]
          %v1187 = vld [vmem:[%s593 + $0x34] sm:$0xf]
          %v1188 = vld [vmem:[%s593 + $0x38] sm:$0xf]
          %v1189 = vld [vmem:[%s593 + $0x3c] sm:$0xf]
          %v1190 = vld [vmem:[%s601] sm:$0x1]
          %v1192 = vlaneseq
          %v1193 = vshrl.u32 %v1192, 7
          %v1194 = vsub.s32 0, %v1193
          %v1195 = vrot.slane %v1190, %v1194
          %v1213 = vunpack.c.l.b16 %v1174
          %v1214 = vunpack.c.l.b16 %v1175
          %v1215 = vunpack.c.l.b16 %v1176
          %v1216 = vunpack.c.l.b16 %v1177
          %v1217 = vunpack.c.l.b16 %v1178
          %v1218 = vunpack.c.l.b16 %v1179
          %v1219 = vunpack.c.l.b16 %v1180
          %v1220 = vunpack.c.l.b16 %v1181
          %v1221 = vunpack.c.l.b16 %v1182
          %v1222 = vunpack.c.l.b16 %v1183
          %v1223 = vunpack.c.l.b16 %v1184
          %v1224 = vunpack.c.l.b16 %v1185
          %v1225 = vunpack.c.l.b16 %v1186
          %v1226 = vunpack.c.l.b16 %v1187
          %v1227 = vunpack.c.l.b16 %v1188
          %v1228 = vunpack.c.l.b16 %v1189
          %v1229 = vpack.c.b16 %v1214, %v1213
          %v1230 = vpack.c.b16 %v1216, %v1215
          %v1231 = vpack.c.b16 %v1218, %v1217
          %v1232 = vpack.c.b16 %v1220, %v1219
          %v1233 = vpack.c.b16 %v1222, %v1221
          %v1234 = vpack.c.b16 %v1224, %v1223
          %v1235 = vpack.c.b16 %v1226, %v1225
          %v1236 = vpack.c.b16 %v1228, %v1227
          %1245 = vmatprep.subr.bf16.mxu0 0
          %1246 = vmatpush1.bf16.msra.mxu0 %v1229
          %1247 = vmatprep.subr.bf16.mxu0 0
          %1248 = vmatpush1.bf16.msra.mxu0 %v1230
          %1249 = vmatprep.subr.bf16.mxu0 0
          %1250 = vmatpush1.bf16.msra.mxu0 %v1231
          %1251 = vmatprep.subr.bf16.mxu0 0
          %1252 = vmatpush1.bf16.msra.mxu0 %v1232
          %1253 = vmatprep.subr.bf16.mxu0 0
          %1254 = vmatpush1.bf16.msra.mxu0 %v1233
          %1255 = vmatprep.subr.bf16.mxu0 0
          %1256 = vmatpush1.bf16.msra.mxu0 %v1234
          %1257 = vmatprep.subr.bf16.mxu0 0
          %1258 = vmatpush1.bf16.msra.mxu0 %v1235
          %1259 = vmatprep.subr.bf16.mxu0 0
          %1260 = vmatpush1.bf16.msra.mxu0 %v1236
          %1261 = vmatprep.subr.bf16.mxu0 0
          %1262 = vmatpush1.bf16.msra.mxu0 0
          %1263 = vmatprep.subr.bf16.mxu0 0
          %1264 = vmatpush1.bf16.msra.mxu0 0
          %1265 = vmatprep.subr.bf16.mxu0 0
          %1266 = vmatpush1.bf16.msra.mxu0 0
          %1267 = vmatprep.subr.bf16.mxu0 0
          %1268 = vmatpush1.bf16.msra.mxu0 0
          %1269 = vmatprep.subr.bf16.mxu0 0
          %1270 = vmatpush1.bf16.msra.mxu0 0
          %1271 = vmatprep.subr.bf16.mxu0 0
          %1272 = vmatpush1.bf16.msra.mxu0 0
          %1273 = vmatprep.subr.bf16.mxu0 0
          %1274 = vmatpush1.bf16.msra.mxu0 0
          %1275 = vmatprep.subr.bf16.mxu0 0
          %1276 = vmatpush1.bf16.msra.mxu0 0
          %1277 = vmatprep.mubr.bf16.mxu0 0
          %1278 = vmatmul.mubr.bf16.gmra.mrb[0].mxu0 %v1166
          %v1279 = vpop.f32.mrb[0].mxu0
          %v1280 = vadd.f32 %v1195, %v1279
          %v1281 = vpop.f32.mrb[0].mxu0
          %v1282 = vpop.f32.mrb[0].mxu0
          %v1283 = vadd.f32 %v1195, %v1282
          %v1284 = vpop.f32.mrb[0].mxu0
          %1285 = vmatprep.mubr.bf16.mxu0 0
          %1286 = vmatmul.mubr.bf16.gmra.mrb[0].mxu0 %v1167
          %v1287 = vpop.f32.mrb[0].mxu0
          %v1288 = vadd.f32 %v1195, %v1287
          %v1289 = vpop.f32.mrb[0].mxu0
          %v1290 = vpop.f32.mrb[0].mxu0
          %v1291 = vadd.f32 %v1195, %v1290
          %v1292 = vpop.f32.mrb[0].mxu0
          %1293 = vmatprep.mubr.bf16.mxu0 0
          %1294 = vmatmul.mubr.bf16.gmra.mrb[0].mxu0 %v1168
          %v1295 = vpop.f32.mrb[0].mxu0
          %v1296 = vadd.f32 %v1195, %v1295
          %v1297 = vpop.f32.mrb[0].mxu0
          %v1298 = vpop.f32.mrb[0].mxu0
          %v1299 = vadd.f32 %v1195, %v1298
          %v1300 = vpop.f32.mrb[0].mxu0
          %1301 = vmatprep.mubr.bf16.mxu0 0
          %1302 = vmatmul.mubr.bf16.gmra.mrb[0].mxu0 %v1169
          %v1303 = vpop.f32.mrb[0].mxu0
          %v1304 = vadd.f32 %v1195, %v1303
          %v1305 = vpop.f32.mrb[0].mxu0
          %v1306 = vpop.f32.mrb[0].mxu0
          %v1307 = vadd.f32 %v1195, %v1306
          %v1308 = vpop.f32.mrb[0].mxu0
          %1309 = vmatprep.mubr.bf16.mxu0 0
          %1310 = vmatmul.mubr.bf16.gmra.mrb[0].mxu0 %v1170
          %v1311 = vpop.f32.mrb[0].mxu0
          %v1312 = vadd.f32 %v1195, %v1311
          %v1313 = vpop.f32.mrb[0].mxu0
          %v1314 = vpop.f32.mrb[0].mxu0
          %v1315 = vadd.f32 %v1195, %v1314
          %v1316 = vpop.f32.mrb[0].mxu0
          %1317 = vmatprep.mubr.bf16.mxu0 0
          %1318 = vmatmul.mubr.bf16.gmra.mrb[0].mxu0 %v1171
          %v1319 = vpop.f32.mrb[0].mxu0
          %v1320 = vadd.f32 %v1195, %v1319
          %v1321 = vpop.f32.mrb[0].mxu0
          %v1322 = vpop.f32.mrb[0].mxu0
          %v1323 = vadd.f32 %v1195, %v1322
          %v1324 = vpop.f32.mrb[0].mxu0
          %1325 = vmatprep.mubr.bf16.mxu0 0
          %1326 = vmatmul.mubr.bf16.gmra.mrb[0].mxu0 %v1172
          %v1327 = vpop.f32.mrb[0].mxu0
          %v1328 = vadd.f32 %v1195, %v1327
          %v1329 = vpop.f32.mrb[0].mxu0
          %v1330 = vpop.f32.mrb[0].mxu0
          %v1331 = vadd.f32 %v1195, %v1330
          %v1332 = vpop.f32.mrb[0].mxu0
          %1333 = vmatprep.mubr.bf16.mxu0 0
          %1334 = vmatmul.mubr.bf16.gmra.mrb[0].mxu0 %v1173
          %v1335 = vpop.f32.mrb[0].mxu0
          %v1336 = vadd.f32 %v1195, %v1335
          %v1337 = vpop.f32.mrb[0].mxu0
          %v1338 = vpop.f32.mrb[0].mxu0
          %v1339 = vadd.f32 %v1195, %v1338
          %v1340 = vpop.f32.mrb[0].mxu0
          %1341 = vdwg.mxu0
          %v1342 = vmax.f32 %v1280, 0.0
          %v1343 = vmax.f32 %v1283, 0.0
          %v1344 = vmax.f32 %v1288, 0.0
          %v1345 = vmax.f32 %v1291, 0.0
          %v1346 = vmax.f32 %v1296, 0.0
          %v1347 = vmax.f32 %v1299, 0.0
          %v1348 = vmax.f32 %v1304, 0.0
          %v1349 = vmax.f32 %v1307, 0.0
          %v1350 = vmax.f32 %v1312, 0.0
          %v1351 = vmax.f32 %v1315, 0.0
          %v1352 = vmax.f32 %v1320, 0.0
          %v1353 = vmax.f32 %v1323, 0.0
          %v1354 = vmax.f32 %v1328, 0.0
          %v1355 = vmax.f32 %v1331, 0.0
          %v1356 = vmax.f32 %v1336, 0.0
          %v1357 = vmax.f32 %v1339, 0.0
          %v1358 = vpack.c.bf16 %v1343, %v1342
          %v1359 = vpack.c.bf16 %v1345, %v1344
          %v1360 = vpack.c.bf16 %v1347, %v1346
          %v1361 = vpack.c.bf16 %v1349, %v1348
          %v1362 = vpack.c.bf16 %v1351, %v1350
          %v1363 = vpack.c.bf16 %v1353, %v1352
          %v1364 = vpack.c.bf16 %v1355, %v1354
          %v1365 = vpack.c.bf16 %v1357, %v1356
          %v1366 = vld [vmem:[%s610] sm:$0xf]
          %v1367 = vld [vmem:[%s610 + $0x4] sm:$0xf]
          %v1368 = vld [vmem:[%s610 + $0x8] sm:$0xf]
          %v1369 = vld [vmem:[%s610 + $0xc] sm:$0xf]
          %v1370 = vld [vmem:[%s610 + $0x10] sm:$0xf]
          %v1371 = vld [vmem:[%s610 + $0x14] sm:$0xf]
          %v1372 = vld [vmem:[%s610 + $0x18] sm:$0xf]
          %v1373 = vld [vmem:[%s610 + $0x1c] sm:$0xf]
          %v1374 = vld [vmem:[%s610 + $0x20] sm:$0xf]
          %v1375 = vld [vmem:[%s610 + $0x24] sm:$0xf]
          %v1376 = vld [vmem:[%s610 + $0x28] sm:$0xf]
          %v1377 = vld [vmem:[%s610 + $0x2c] sm:$0xf]
          %v1378 = vld [vmem:[%s610 + $0x30] sm:$0xf]
          %v1379 = vld [vmem:[%s610 + $0x34] sm:$0xf]
          %v1380 = vld [vmem:[%s610 + $0x38] sm:$0xf]
          %v1381 = vld [vmem:[%s610 + $0x3c] sm:$0xf]
          %v1382 = vld [vmem:[%s618] sm:$0x1]
          %v1384 = vlaneseq
          %v1385 = vshrl.u32 %v1384, 7
          %v1386 = vsub.s32 0, %v1385
          %v1387 = vrot.slane %v1382, %v1386
          %v1405 = vunpack.c.l.b16 %v1366
          %v1406 = vunpack.c.l.b16 %v1367
          %v1407 = vunpack.c.l.b16 %v1368
          %v1408 = vunpack.c.l.b16 %v1369
          %v1409 = vunpack.c.l.b16 %v1370
          %v1410 = vunpack.c.l.b16 %v1371
          %v1411 = vunpack.c.l.b16 %v1372
          %v1412 = vunpack.c.l.b16 %v1373
          %v1413 = vunpack.c.l.b16 %v1374
          %v1414 = vunpack.c.l.b16 %v1375
          %v1415 = vunpack.c.l.b16 %v1376
          %v1416 = vunpack.c.l.b16 %v1377
          %v1417 = vunpack.c.l.b16 %v1378
          %v1418 = vunpack.c.l.b16 %v1379
          %v1419 = vunpack.c.l.b16 %v1380
          %v1420 = vunpack.c.l.b16 %v1381
          %v1421 = vpack.c.b16 %v1406, %v1405
          %v1422 = vpack.c.b16 %v1408, %v1407
          %v1423 = vpack.c.b16 %v1410, %v1409
          %v1424 = vpack.c.b16 %v1412, %v1411
          %v1425 = vpack.c.b16 %v1414, %v1413
          %v1426 = vpack.c.b16 %v1416, %v1415
          %v1427 = vpack.c.b16 %v1418, %v1417
          %v1428 = vpack.c.b16 %v1420, %v1419
          %1437 = vmatprep.subr.bf16.mxu0 0
          %1438 = vmatpush1.bf16.msra.mxu0 %v1421
          %1439 = vmatprep.subr.bf16.mxu0 0
          %1440 = vmatpush1.bf16.msra.mxu0 %v1422
          %1441 = vmatprep.subr.bf16.mxu0 0
          %1442 = vmatpush1.bf16.msra.mxu0 %v1423
          %1443 = vmatprep.subr.bf16.mxu0 0
          %1444 = vmatpush1.bf16.msra.mxu0 %v1424
          %1445 = vmatprep.subr.bf16.mxu0 0
          %1446 = vmatpush1.bf16.msra.mxu0 %v1425
          %1447 = vmatprep.subr.bf16.mxu0 0
          %1448 = vmatpush1.bf16.msra.mxu0 %v1426
          %1449 = vmatprep.subr.bf16.mxu0 0
          %1450 = vmatpush1.bf16.msra.mxu0 %v1427
          %1451 = vmatprep.subr.bf16.mxu0 0
          %1452 = vmatpush1.bf16.msra.mxu0 %v1428
          %1453 = vmatprep.subr.bf16.mxu0 0
          %1454 = vmatpush1.bf16.msra.mxu0 0
          %1455 = vmatprep.subr.bf16.mxu0 0
          %1456 = vmatpush1.bf16.msra.mxu0 0
          %1457 = vmatprep.subr.bf16.mxu0 0
          %1458 = vmatpush1.bf16.msra.mxu0 0
          %1459 = vmatprep.subr.bf16.mxu0 0
          %1460 = vmatpush1.bf16.msra.mxu0 0
          %1461 = vmatprep.subr.bf16.mxu0 0
          %1462 = vmatpush1.bf16.msra.mxu0 0
          %1463 = vmatprep.subr.bf16.mxu0 0
          %1464 = vmatpush1.bf16.msra.mxu0 0
          %1465 = vmatprep.subr.bf16.mxu0 0
          %1466 = vmatpush1.bf16.msra.mxu0 0
          %1467 = vmatprep.subr.bf16.mxu0 0
          %1468 = vmatpush1.bf16.msra.mxu0 0
          %1469 = vmatprep.mubr.bf16.mxu0 0
          %1470 = vmatmul.mubr.bf16.gmra.mrb[0].mxu0 %v1358
          %v1471 = vpop.f32.mrb[0].mxu0
          %v1472 = vadd.f32 %v1387, %v1471
          %v1473 = vpop.f32.mrb[0].mxu0
          %v1474 = vpop.f32.mrb[0].mxu0
          %v1475 = vadd.f32 %v1387, %v1474
          %v1476 = vpop.f32.mrb[0].mxu0
          %1477 = vmatprep.mubr.bf16.mxu0 0
          %1478 = vmatmul.mubr.bf16.gmra.mrb[0].mxu0 %v1359
          %v1479 = vpop.f32.mrb[0].mxu0
          %v1480 = vadd.f32 %v1387, %v1479
          %v1481 = vpop.f32.mrb[0].mxu0
          %v1482 = vpop.f32.mrb[0].mxu0
          %v1483 = vadd.f32 %v1387, %v1482
          %v1484 = vpop.f32.mrb[0].mxu0
          %1485 = vmatprep.mubr.bf16.mxu0 0
          %1486 = vmatmul.mubr.bf16.gmra.mrb[0].mxu0 %v1360
          %v1487 = vpop.f32.mrb[0].mxu0
          %v1488 = vadd.f32 %v1387, %v1487
          %v1489 = vpop.f32.mrb[0].mxu0
          %v1490 = vpop.f32.mrb[0].mxu0
          %v1491 = vadd.f32 %v1387, %v1490
          %v1492 = vpop.f32.mrb[0].mxu0
          %1493 = vmatprep.mubr.bf16.mxu0 0
          %1494 = vmatmul.mubr.bf16.gmra.mrb[0].mxu0 %v1361
          %v1495 = vpop.f32.mrb[0].mxu0
          %v1496 = vadd.f32 %v1387, %v1495
          %v1497 = vpop.f32.mrb[0].mxu0
          %v1498 = vpop.f32.mrb[0].mxu0
          %v1499 = vadd.f32 %v1387, %v1498
          %v1500 = vpop.f32.mrb[0].mxu0
          %1501 = vmatprep.mubr.bf16.mxu0 0
          %1502 = vmatmul.mubr.bf16.gmra.mrb[0].mxu0 %v1362
          %v1503 = vpop.f32.mrb[0].mxu0
          %v1504 = vadd.f32 %v1387, %v1503
          %v1505 = vpop.f32.mrb[0].mxu0
          %v1506 = vpop.f32.mrb[0].mxu0
          %v1507 = vadd.f32 %v1387, %v1506
          %v1508 = vpop.f32.mrb[0].mxu0
          %1509 = vmatprep.mubr.bf16.mxu0 0
          %1510 = vmatmul.mubr.bf16.gmra.mrb[0].mxu0 %v1363
          %v1511 = vpop.f32.mrb[0].mxu0
          %v1512 = vadd.f32 %v1387, %v1511
          %v1513 = vpop.f32.mrb[0].mxu0
          %v1514 = vpop.f32.mrb[0].mxu0
          %v1515 = vadd.f32 %v1387, %v1514
          %v1516 = vpop.f32.mrb[0].mxu0
          %1517 = vmatprep.mubr.bf16.mxu0 0
          %1518 = vmatmul.mubr.bf16.gmra.mrb[0].mxu0 %v1364
          %v1519 = vpop.f32.mrb[0].mxu0
          %v1520 = vadd.f32 %v1387, %v1519
          %v1521 = vpop.f32.mrb[0].mxu0
          %v1522 = vpop.f32.mrb[0].mxu0
          %v1523 = vadd.f32 %v1387, %v1522
          %v1524 = vpop.f32.mrb[0].mxu0
          %1525 = vmatprep.mubr.bf16.mxu0 0
          %1526 = vmatmul.mubr.bf16.gmra.mrb[0].mxu0 %v1365
          %v1527 = vpop.f32.mrb[0].mxu0
          %v1528 = vadd.f32 %v1387, %v1527
          %v1529 = vpop.f32.mrb[0].mxu0
          %v1530 = vpop.f32.mrb[0].mxu0
          %v1531 = vadd.f32 %v1387, %v1530
          %v1532 = vpop.f32.mrb[0].mxu0
          %1533 = vdwg.mxu0
          %v1534 = vmax.f32 %v1472, 0.0
          %v1535 = vmax.f32 %v1475, 0.0
          %v1536 = vmax.f32 %v1480, 0.0
          %v1537 = vmax.f32 %v1483, 0.0
          %v1538 = vmax.f32 %v1488, 0.0
          %v1539 = vmax.f32 %v1491, 0.0
          %v1540 = vmax.f32 %v1496, 0.0
          %v1541 = vmax.f32 %v1499, 0.0
          %v1542 = vmax.f32 %v1504, 0.0
          %v1543 = vmax.f32 %v1507, 0.0
          %v1544 = vmax.f32 %v1512, 0.0
          %v1545 = vmax.f32 %v1515, 0.0
          %v1546 = vmax.f32 %v1520, 0.0
          %v1547 = vmax.f32 %v1523, 0.0
          %v1548 = vmax.f32 %v1528, 0.0
          %v1549 = vmax.f32 %v1531, 0.0
          %v1550 = vpack.c.bf16 %v1535, %v1534
          %v1551 = vpack.c.bf16 %v1537, %v1536
          %v1552 = vpack.c.bf16 %v1539, %v1538
          %v1553 = vpack.c.bf16 %v1541, %v1540
          %v1554 = vpack.c.bf16 %v1543, %v1542
          %v1555 = vpack.c.bf16 %v1545, %v1544
          %v1556 = vpack.c.bf16 %v1547, %v1546
          %v1557 = vpack.c.bf16 %v1549, %v1548
          %s1558 = sadd.s32 %s1106, 16
          %s1559 = smul.addr %s1558, 8
          %s1560 = scalar_lea.vmem [#allocation2], %s1559
          %1561 = vst [vmem:[%s1560] sm:$0xff] %v1550
          %1562 = vst [vmem:[%s1560 + $0x8] sm:$0xff] %v1551
          %1563 = vst [vmem:[%s1560 + $0x10] sm:$0xff] %v1552
          %1564 = vst [vmem:[%s1560 + $0x18] sm:$0xff] %v1553
          %1565 = vst [vmem:[%s1560 + $0x20] sm:$0xff] %v1554
          %1566 = vst [vmem:[%s1560 + $0x28] sm:$0xff] %v1555
          %1567 = vst [vmem:[%s1560 + $0x30] sm:$0xff] %v1556
          %1568 = vst [vmem:[%s1560 + $0x38] sm:$0xff] %v1557
          %v1569 = vld [vmem:[%s627] sm:$0xf]
          %v1570 = vld [vmem:[%s627 + $0x4] sm:$0xf]
          %v1571 = vld [vmem:[%s627 + $0x8] sm:$0xf]
          %v1572 = vld [vmem:[%s627 + $0xc] sm:$0xf]
          %v1573 = vld [vmem:[%s627 + $0x10] sm:$0xf]
          %v1574 = vld [vmem:[%s627 + $0x14] sm:$0xf]
          %v1575 = vld [vmem:[%s627 + $0x18] sm:$0xf]
          %v1576 = vld [vmem:[%s627 + $0x1c] sm:$0xf]
          %v1577 = vld [vmem:[%s627 + $0x20] sm:$0xf]
          %v1578 = vld [vmem:[%s627 + $0x24] sm:$0xf]
          %v1579 = vld [vmem:[%s627 + $0x28] sm:$0xf]
          %v1580 = vld [vmem:[%s627 + $0x2c] sm:$0xf]
          %v1581 = vld [vmem:[%s627 + $0x30] sm:$0xf]
          %v1582 = vld [vmem:[%s627 + $0x34] sm:$0xf]
          %v1583 = vld [vmem:[%s627 + $0x38] sm:$0xf]
          %v1584 = vld [vmem:[%s627 + $0x3c] sm:$0xf]
          %v1601 = vunpack.c.l.b16 %v1569
          %v1602 = vunpack.c.l.b16 %v1570
          %v1603 = vunpack.c.l.b16 %v1571
          %v1604 = vunpack.c.l.b16 %v1572
          %v1605 = vunpack.c.l.b16 %v1573
          %v1606 = vunpack.c.l.b16 %v1574
          %v1607 = vunpack.c.l.b16 %v1575
          %v1608 = vunpack.c.l.b16 %v1576
          %v1609 = vunpack.c.l.b16 %v1577
          %v1610 = vunpack.c.l.b16 %v1578
          %v1611 = vunpack.c.l.b16 %v1579
          %v1612 = vunpack.c.l.b16 %v1580
          %v1613 = vunpack.c.l.b16 %v1581
          %v1614 = vunpack.c.l.b16 %v1582
          %v1615 = vunpack.c.l.b16 %v1583
          %v1616 = vunpack.c.l.b16 %v1584
          %v1617 = vpack.c.b16 %v1602, %v1601
          %v1618 = vpack.c.b16 %v1604, %v1603
          %v1619 = vpack.c.b16 %v1606, %v1605
          %v1620 = vpack.c.b16 %v1608, %v1607
          %v1621 = vpack.c.b16 %v1610, %v1609
          %v1622 = vpack.c.b16 %v1612, %v1611
          %v1623 = vpack.c.b16 %v1614, %v1613
          %v1624 = vpack.c.b16 %v1616, %v1615
          %1633 = vmatprep.subr.bf16.mxu0 0
          %1634 = vmatpush1.bf16.msra.mxu0 %v1617
          %1635 = vmatprep.subr.bf16.mxu0 0
          %1636 = vmatpush1.bf16.msra.mxu0 %v1618
          %1637 = vmatprep.subr.bf16.mxu0 0
          %1638 = vmatpush1.bf16.msra.mxu0 %v1619
          %1639 = vmatprep.subr.bf16.mxu0 0
          %1640 = vmatpush1.bf16.msra.mxu0 %v1620
          %1641 = vmatprep.subr.bf16.mxu0 0
          %1642 = vmatpush1.bf16.msra.mxu0 %v1621
          %1643 = vmatprep.subr.bf16.mxu0 0
          %1644 = vmatpush1.bf16.msra.mxu0 %v1622
          %1645 = vmatprep.subr.bf16.mxu0 0
          %1646 = vmatpush1.bf16.msra.mxu0 %v1623
          %1647 = vmatprep.subr.bf16.mxu0 0
          %1648 = vmatpush1.bf16.msra.mxu0 %v1624
          %1649 = vmatprep.subr.bf16.mxu0 0
          %1650 = vmatpush1.bf16.msra.mxu0 0
          %1651 = vmatprep.subr.bf16.mxu0 0
          %1652 = vmatpush1.bf16.msra.mxu0 0
          %1653 = vmatprep.subr.bf16.mxu0 0
          %1654 = vmatpush1.bf16.msra.mxu0 0
          %1655 = vmatprep.subr.bf16.mxu0 0
          %1656 = vmatpush1.bf16.msra.mxu0 0
          %1657 = vmatprep.subr.bf16.mxu0 0
          %1658 = vmatpush1.bf16.msra.mxu0 0
          %1659 = vmatprep.subr.bf16.mxu0 0
          %1660 = vmatpush1.bf16.msra.mxu0 0
          %1661 = vmatprep.subr.bf16.mxu0 0
          %1662 = vmatpush1.bf16.msra.mxu0 0
          %1663 = vmatprep.subr.bf16.mxu0 0
          %1664 = vmatpush1.bf16.msra.mxu0 0
          %1665 = vmatprep.mubr.bf16.mxu0 0
          %1666 = vmatmul.mubr.bf16.gmra.mrb[0].mxu0 %v1550
          %v1667 = vpop.f32.mrb[0].mxu0
          %v1668 = vadd.f32 0.0, %v1667
          %v1669 = vpop.f32.mrb[0].mxu0
          %v1670 = vpop.f32.mrb[0].mxu0
          %v1671 = vadd.f32 0.0, %v1670
          %v1672 = vpop.f32.mrb[0].mxu0
          %1673 = vmatprep.mubr.bf16.mxu0 0
          %1674 = vmatmul.mubr.bf16.gmra.mrb[0].mxu0 %v1551
          %v1675 = vpop.f32.mrb[0].mxu0
          %v1676 = vadd.f32 0.0, %v1675
          %v1677 = vpop.f32.mrb[0].mxu0
          %v1678 = vpop.f32.mrb[0].mxu0
          %v1679 = vadd.f32 0.0, %v1678
          %v1680 = vpop.f32.mrb[0].mxu0
          %1681 = vmatprep.mubr.bf16.mxu0 0
          %1682 = vmatmul.mubr.bf16.gmra.mrb[0].mxu0 %v1552
          %v1683 = vpop.f32.mrb[0].mxu0
          %v1684 = vadd.f32 0.0, %v1683
          %v1685 = vpop.f32.mrb[0].mxu0
          %v1686 = vpop.f32.mrb[0].mxu0
          %v1687 = vadd.f32 0.0, %v1686
          %v1688 = vpop.f32.mrb[0].mxu0
          %1689 = vmatprep.mubr.bf16.mxu0 0
          %1690 = vmatmul.mubr.bf16.gmra.mrb[0].mxu0 %v1553
          %v1691 = vpop.f32.mrb[0].mxu0
          %v1692 = vadd.f32 0.0, %v1691
          %v1693 = vpop.f32.mrb[0].mxu0
          %v1694 = vpop.f32.mrb[0].mxu0
          %v1695 = vadd.f32 0.0, %v1694
          %v1696 = vpop.f32.mrb[0].mxu0
          %1697 = vmatprep.mubr.bf16.mxu0 0
          %1698 = vmatmul.mubr.bf16.gmra.mrb[0].mxu0 %v1554
          %v1699 = vpop.f32.mrb[0].mxu0
          %v1700 = vadd.f32 0.0, %v1699
          %v1701 = vpop.f32.mrb[0].mxu0
          %v1702 = vpop.f32.mrb[0].mxu0
          %v1703 = vadd.f32 0.0, %v1702
          %v1704 = vpop.f32.mrb[0].mxu0
          %1705 = vmatprep.mubr.bf16.mxu0 0
          %1706 = vmatmul.mubr.bf16.gmra.mrb[0].mxu0 %v1555
          %v1707 = vpop.f32.mrb[0].mxu0
          %v1708 = vadd.f32 0.0, %v1707
          %v1709 = vpop.f32.mrb[0].mxu0
          %v1710 = vpop.f32.mrb[0].mxu0
          %v1711 = vadd.f32 0.0, %v1710
          %v1712 = vpop.f32.mrb[0].mxu0
          %1713 = vmatprep.mubr.bf16.mxu0 0
          %1714 = vmatmul.mubr.bf16.gmra.mrb[0].mxu0 %v1556
          %v1715 = vpop.f32.mrb[0].mxu0
          %v1716 = vadd.f32 0.0, %v1715
          %v1717 = vpop.f32.mrb[0].mxu0
          %v1718 = vpop.f32.mrb[0].mxu0
          %v1719 = vadd.f32 0.0, %v1718
          %v1720 = vpop.f32.mrb[0].mxu0
          %1721 = vmatprep.mubr.bf16.mxu0 0
          %1722 = vmatmul.mubr.bf16.gmra.mrb[0].mxu0 %v1557
          %v1723 = vpop.f32.mrb[0].mxu0
          %v1724 = vadd.f32 0.0, %v1723
          %v1725 = vpop.f32.mrb[0].mxu0
          %v1726 = vpop.f32.mrb[0].mxu0
          %v1727 = vadd.f32 0.0, %v1726
          %v1728 = vpop.f32.mrb[0].mxu0
          %1729 = vdwg.mxu0
          %v1730 = vld [vmem:[#allocation4] sm:$0xff]
          %v1731 = vld [vmem:[%s704] sm:$0xf]
          %v1732 = vpack.c.bf16 %v1671, %v1668
          %v1733 = vpack.c.bf16 %v1679, %v1676
          %v1734 = vpack.c.bf16 %v1687, %v1684
          %v1735 = vpack.c.bf16 %v1695, %v1692
          %v1736 = vpack.c.bf16 %v1703, %v1700
          %v1737 = vpack.c.bf16 %v1711, %v1708
          %v1738 = vpack.c.bf16 %v1719, %v1716
          %v1739 = vpack.c.bf16 %v1727, %v1724
          %1740 = vmatprep.subr.bf16.mxu0 0
          %1741 = vmatpush1.bf16.msra.mxu0 %v1732
          %1742 = vmatprep.subr.bf16.mxu0 0
          %1743 = vmatpush1.bf16.msra.mxu0 %v1733
          %1744 = vmatprep.subr.bf16.mxu0 0
          %1745 = vmatpush1.bf16.msra.mxu0 %v1734
          %1746 = vmatprep.subr.bf16.mxu0 0
          %1747 = vmatpush1.bf16.msra.mxu0 %v1735
          %1748 = vmatprep.subr.bf16.mxu0 0
          %1749 = vmatpush1.bf16.msra.mxu0 %v1736
          %1750 = vmatprep.subr.bf16.mxu0 0
          %1751 = vmatpush1.bf16.msra.mxu0 %v1737
          %1752 = vmatprep.subr.bf16.mxu0 0
          %1753 = vmatpush1.bf16.msra.mxu0 %v1738
          %1754 = vmatprep.subr.bf16.mxu0 0
          %1755 = vmatpush1.bf16.msra.mxu0 %v1739
          %1756 = vmatprep.subr.bf16.mxu0 0
          %1757 = vmatpush1.bf16.msra.mxu0 0
          %1758 = vmatprep.subr.bf16.mxu0 0
          %1759 = vmatpush1.bf16.msra.mxu0 0
          %1760 = vmatprep.subr.bf16.mxu0 0
          %1761 = vmatpush1.bf16.msra.mxu0 0
          %1762 = vmatprep.subr.bf16.mxu0 0
          %1763 = vmatpush1.bf16.msra.mxu0 0
          %1764 = vmatprep.subr.bf16.mxu0 0
          %1765 = vmatpush1.bf16.msra.mxu0 0
          %1766 = vmatprep.subr.bf16.mxu0 0
          %1767 = vmatpush1.bf16.msra.mxu0 0
          %1768 = vmatprep.subr.bf16.mxu0 0
          %1769 = vmatpush1.bf16.msra.mxu0 0
          %1770 = vmatprep.subr.bf16.mxu0 0
          %1771 = vmatpush1.bf16.msra.mxu0 0
          %1772 = vmatprep.mubr.bf16.mxu0 0
          %1773 = vmatmul.mubr.bf16.gmra.mrb[0].mxu0 %v1731
          %v1774 = vpop.f32.mrb[0].mxu0
          %v1775 = vadd.f32 0.0, %v1774
          %v1776 = vpop.f32.mrb[0].mxu0
          %v1777 = vpop.f32.mrb[0].mxu0
          %v1778 = vpop.f32.mrb[0].mxu0
          %1779 = vdwg.mxu0
          %v1780 = vadd.f32 %v1730, %v1775
          %1781 = vst [vmem:[#allocation4] sm:$0xff] %v1780
        $region120: #{tpu_custom_call.1} parent=71 // pred_fallthru
          _
        %p1782 = scmp.eq.s32.totalorder %s36, 1
        %p1783 = pnand %p1102, %p1782
        %p1784 = pneg %p1783
        %p1785 = scmp.lt.s32.totalorder %s35, 2
        %p1786 = pnand %p1784, %p1785
        %p1787 = pneg %p1786
        // Predicated region
        $region121: #{tpu_custom_call.1} parent=71 // pred_check
          _
        $region122: #{tpu_custom_call.1} parent=71 // pred_check_branch
          %1789 = sbr.rel (%p1786) target = $region124
        $region123: #{tpu_custom_call.1} parent=71 // pred_region
          %s1790 = scalar_lea.vmem [#allocation2], 128
          %v1791 = vld [vmem:[%s1790] sm:$0xff]
          %v1792 = vld [vmem:[%s1790 + $0x8] sm:$0xff]
          %v1793 = vld [vmem:[%s1790 + $0x10] sm:$0xff]
          %v1794 = vld [vmem:[%s1790 + $0x18] sm:$0xff]
          %v1795 = vld [vmem:[%s1790 + $0x20] sm:$0xff]
          %v1796 = vld [vmem:[%s1790 + $0x28] sm:$0xff]
          %v1797 = vld [vmem:[%s1790 + $0x30] sm:$0xff]
          %v1798 = vld [vmem:[%s1790 + $0x38] sm:$0xff]
          %v1799 = vld [vmem:[%s1790 + $0x40] sm:$0xff]
          %v1800 = vld [vmem:[%s1790 + $0x48] sm:$0xff]
          %v1801 = vld [vmem:[%s1790 + $0x50] sm:$0xff]
          %v1802 = vld [vmem:[%s1790 + $0x58] sm:$0xff]
          %v1803 = vld [vmem:[%s1790 + $0x60] sm:$0xff]
          %v1804 = vld [vmem:[%s1790 + $0x68] sm:$0xff]
          %v1805 = vld [vmem:[%s1790 + $0x70] sm:$0xff]
          %v1806 = vld [vmem:[%s1790 + $0x78] sm:$0xff]
          %1807 = vst [vmem:[#allocation2] sm:$0xff] %v1791
          %1808 = vst [vmem:[#allocation2 + $0x8] sm:$0xff] %v1792
          %1809 = vst [vmem:[#allocation2 + $0x10] sm:$0xff] %v1793
          %1810 = vst [vmem:[#allocation2 + $0x18] sm:$0xff] %v1794
          %1811 = vst [vmem:[#allocation2 + $0x20] sm:$0xff] %v1795
          %1812 = vst [vmem:[#allocation2 + $0x28] sm:$0xff] %v1796
          %1813 = vst [vmem:[#allocation2 + $0x30] sm:$0xff] %v1797
          %1814 = vst [vmem:[#allocation2 + $0x38] sm:$0xff] %v1798
          %1815 = vst [vmem:[#allocation2 + $0x40] sm:$0xff] %v1799
          %1816 = vst [vmem:[#allocation2 + $0x48] sm:$0xff] %v1800
          %1817 = vst [vmem:[#allocation2 + $0x50] sm:$0xff] %v1801
          %1818 = vst [vmem:[#allocation2 + $0x58] sm:$0xff] %v1802
          %1819 = vst [vmem:[#allocation2 + $0x60] sm:$0xff] %v1803
          %1820 = vst [vmem:[#allocation2 + $0x68] sm:$0xff] %v1804
          %1821 = vst [vmem:[#allocation2 + $0x70] sm:$0xff] %v1805
          %1822 = vst [vmem:[#allocation2 + $0x78] sm:$0xff] %v1806
        $region124: #{tpu_custom_call.1} parent=71 // pred_fallthru
          _
        %p1823 = scmp.eq.s32.totalorder %s35, 2
        %p1824 = pnand %p1823, %p1782
        %p1825 = pneg %p1824
        %p1826 = pnand %p1825, %p1102
        %p1827 = pneg %p1826
        // Predicated region
        $region125: #{tpu_custom_call.1} parent=71 // pred_check
          _
        $region126: #{tpu_custom_call.1} parent=71 // pred_check_branch
          %1829 = sbr.rel (%p1826) target = $region128
        $region127: #{tpu_custom_call.1} parent=71 // pred_region
          %v1830 = vld [vmem:[#allocation4] sm:$0xff]
          %v1831 = vld [vmem:[%s8] sm:$0xff]
          %v1832 = vadd.f32 %v1830, %v1831
          %v1833 = vpack.c.bf16 %v1832, %v1832
          %v1834 = vld [vmem:[#allocation15] sm:$0xf]
          %v1835 = vld [vmem:[#allocation15 + $0x4] sm:$0xf]
          %v1836 = vld [vmem:[#allocation15 + $0x8] sm:$0xf]
          %v1837 = vld [vmem:[#allocation15 + $0xc] sm:$0xf]
          %v1838 = vld [vmem:[#allocation15 + $0x10] sm:$0xf]
          %v1839 = vld [vmem:[#allocation15 + $0x14] sm:$0xf]
          %v1840 = vld [vmem:[#allocation15 + $0x18] sm:$0xf]
          %v1841 = vld [vmem:[#allocation15 + $0x1c] sm:$0xf]
          %v1842 = vld [vmem:[#allocation15 + $0x20] sm:$0xf]
          %v1843 = vld [vmem:[#allocation15 + $0x24] sm:$0xf]
          %v1844 = vld [vmem:[#allocation15 + $0x28] sm:$0xf]
          %v1845 = vld [vmem:[#allocation15 + $0x2c] sm:$0xf]
          %v1846 = vld [vmem:[#allocation15 + $0x30] sm:$0xf]
          %v1847 = vld [vmem:[#allocation15 + $0x34] sm:$0xf]
          %v1848 = vld [vmem:[#allocation15 + $0x38] sm:$0xf]
          %v1849 = vld [vmem:[#allocation15 + $0x3c] sm:$0xf]
          %v1850 = vld [vmem:[%s10] sm:$0x1]
          %v1852 = vlaneseq
          %v1853 = vshrl.u32 %v1852, 7
          %v1854 = vsub.s32 0, %v1853
          %v1855 = vrot.slane %v1850, %v1854
          %v1873 = vunpack.c.l.b16 %v1834
          %v1874 = vunpack.c.l.b16 %v1835
          %v1875 = vunpack.c.l.b16 %v1836
          %v1876 = vunpack.c.l.b16 %v1837
          %v1877 = vunpack.c.l.b16 %v1838
          %v1878 = vunpack.c.l.b16 %v1839
          %v1879 = vunpack.c.l.b16 %v1840
          %v1880 = vunpack.c.l.b16 %v1841
          %v1881 = vunpack.c.l.b16 %v1842
          %v1882 = vunpack.c.l.b16 %v1843
          %v1883 = vunpack.c.l.b16 %v1844
          %v1884 = vunpack.c.l.b16 %v1845
          %v1885 = vunpack.c.l.b16 %v1846
          %v1886 = vunpack.c.l.b16 %v1847
          %v1887 = vunpack.c.l.b16 %v1848
          %v1888 = vunpack.c.l.b16 %v1849
          %v1889 = vpack.c.b16 %v1874, %v1873
          %v1890 = vpack.c.b16 %v1876, %v1875
          %v1891 = vpack.c.b16 %v1878, %v1877
          %v1892 = vpack.c.b16 %v1880, %v1879
          %v1893 = vpack.c.b16 %v1882, %v1881
          %v1894 = vpack.c.b16 %v1884, %v1883
          %v1895 = vpack.c.b16 %v1886, %v1885
          %v1896 = vpack.c.b16 %v1888, %v1887
          %1905 = vmatprep.subr.bf16.mxu0 0
          %1906 = vmatpush1.bf16.msra.mxu0 %v1889
          %1907 = vmatprep.subr.bf16.mxu0 0
          %1908 = vmatpush1.bf16.msra.mxu0 %v1890
          %1909 = vmatprep.subr.bf16.mxu0 0
          %1910 = vmatpush1.bf16.msra.mxu0 %v1891
          %1911 = vmatprep.subr.bf16.mxu0 0
          %1912 = vmatpush1.bf16.msra.mxu0 %v1892
          %1913 = vmatprep.subr.bf16.mxu0 0
          %1914 = vmatpush1.bf16.msra.mxu0 %v1893
          %1915 = vmatprep.subr.bf16.mxu0 0
          %1916 = vmatpush1.bf16.msra.mxu0 %v1894
          %1917 = vmatprep.subr.bf16.mxu0 0
          %1918 = vmatpush1.bf16.msra.mxu0 %v1895
          %1919 = vmatprep.subr.bf16.mxu0 0
          %1920 = vmatpush1.bf16.msra.mxu0 %v1896
          %1921 = vmatprep.subr.bf16.mxu0 0
          %1922 = vmatpush1.bf16.msra.mxu0 0
          %1923 = vmatprep.subr.bf16.mxu0 0
          %1924 = vmatpush1.bf16.msra.mxu0 0
          %1925 = vmatprep.subr.bf16.mxu0 0
          %1926 = vmatpush1.bf16.msra.mxu0 0
          %1927 = vmatprep.subr.bf16.mxu0 0
          %1928 = vmatpush1.bf16.msra.mxu0 0
          %1929 = vmatprep.subr.bf16.mxu0 0
          %1930 = vmatpush1.bf16.msra.mxu0 0
          %1931 = vmatprep.subr.bf16.mxu0 0
          %1932 = vmatpush1.bf16.msra.mxu0 0
          %1933 = vmatprep.subr.bf16.mxu0 0
          %1934 = vmatpush1.bf16.msra.mxu0 0
          %1935 = vmatprep.subr.bf16.mxu0 0
          %1936 = vmatpush1.bf16.msra.mxu0 0
          %1937 = vmatprep.mubr.bf16.mxu0 0
          %1938 = vmatmul.mubr.bf16.gmra.mrb[0].mxu0 %v1833
          %v1939 = vpop.f32.mrb[0].mxu0
          %v1940 = vadd.f32 %v1855, %v1939
          %v1941 = vpop.f32.mrb[0].mxu0
          %v1942 = vpop.f32.mrb[0].mxu0
          %v1943 = vpop.f32.mrb[0].mxu0
          %1944 = vdwg.mxu0
          %v1945 = vmax.f32 %v1940, 0.0
          %v1946 = vpack.c.bf16 %v1945, %v1945
          %v1947 = vld [vmem:[#allocation16] sm:$0xf]
          %v1948 = vld [vmem:[#allocation16 + $0x4] sm:$0xf]
          %v1949 = vld [vmem:[#allocation16 + $0x8] sm:$0xf]
          %v1950 = vld [vmem:[#allocation16 + $0xc] sm:$0xf]
          %v1951 = vld [vmem:[#allocation16 + $0x10] sm:$0xf]
          %v1952 = vld [vmem:[#allocation16 + $0x14] sm:$0xf]
          %v1953 = vld [vmem:[#allocation16 + $0x18] sm:$0xf]
          %v1954 = vld [vmem:[#allocation16 + $0x1c] sm:$0xf]
          %v1955 = vld [vmem:[#allocation16 + $0x20] sm:$0xf]
          %v1956 = vld [vmem:[#allocation16 + $0x24] sm:$0xf]
          %v1957 = vld [vmem:[#allocation16 + $0x28] sm:$0xf]
          %v1958 = vld [vmem:[#allocation16 + $0x2c] sm:$0xf]
          %v1959 = vld [vmem:[#allocation16 + $0x30] sm:$0xf]
          %v1960 = vld [vmem:[#allocation16 + $0x34] sm:$0xf]
          %v1961 = vld [vmem:[#allocation16 + $0x38] sm:$0xf]
          %v1962 = vld [vmem:[#allocation16 + $0x3c] sm:$0xf]
          %v1963 = vld [vmem:[%s12] sm:$0x1]
          %v1965 = vlaneseq
          %v1966 = vshrl.u32 %v1965, 7
          %v1967 = vsub.s32 0, %v1966
          %v1968 = vrot.slane %v1963, %v1967
          %v1986 = vunpack.c.l.b16 %v1947
          %v1987 = vunpack.c.l.b16 %v1948
          %v1988 = vunpack.c.l.b16 %v1949
          %v1989 = vunpack.c.l.b16 %v1950
          %v1990 = vunpack.c.l.b16 %v1951
          %v1991 = vunpack.c.l.b16 %v1952
          %v1992 = vunpack.c.l.b16 %v1953
          %v1993 = vunpack.c.l.b16 %v1954
          %v1994 = vunpack.c.l.b16 %v1955
          %v1995 = vunpack.c.l.b16 %v1956
          %v1996 = vunpack.c.l.b16 %v1957
          %v1997 = vunpack.c.l.b16 %v1958
          %v1998 = vunpack.c.l.b16 %v1959
          %v1999 = vunpack.c.l.b16 %v1960
          %v2000 = vunpack.c.l.b16 %v1961
          %v2001 = vunpack.c.l.b16 %v1962
          %v2002 = vpack.c.b16 %v1987, %v1986
          %v2003 = vpack.c.b16 %v1989, %v1988
          %v2004 = vpack.c.b16 %v1991, %v1990
          %v2005 = vpack.c.b16 %v1993, %v1992
          %v2006 = vpack.c.b16 %v1995, %v1994
          %v2007 = vpack.c.b16 %v1997, %v1996
          %v2008 = vpack.c.b16 %v1999, %v1998
          %v2009 = vpack.c.b16 %v2001, %v2000
          %2018 = vmatprep.subr.bf16.mxu0 0
          %2019 = vmatpush1.bf16.msra.mxu0 %v2002
          %2020 = vmatprep.subr.bf16.mxu0 0
          %2021 = vmatpush1.bf16.msra.mxu0 %v2003
          %2022 = vmatprep.subr.bf16.mxu0 0
          %2023 = vmatpush1.bf16.msra.mxu0 %v2004
          %2024 = vmatprep.subr.bf16.mxu0 0
          %2025 = vmatpush1.bf16.msra.mxu0 %v2005
          %2026 = vmatprep.subr.bf16.mxu0 0
          %2027 = vmatpush1.bf16.msra.mxu0 %v2006
          %2028 = vmatprep.subr.bf16.mxu0 0
          %2029 = vmatpush1.bf16.msra.mxu0 %v2007
          %2030 = vmatprep.subr.bf16.mxu0 0
          %2031 = vmatpush1.bf16.msra.mxu0 %v2008
          %2032 = vmatprep.subr.bf16.mxu0 0
          %2033 = vmatpush1.bf16.msra.mxu0 %v2009
          %2034 = vmatprep.subr.bf16.mxu0 0
          %2035 = vmatpush1.bf16.msra.mxu0 0
          %2036 = vmatprep.subr.bf16.mxu0 0
          %2037 = vmatpush1.bf16.msra.mxu0 0
          %2038 = vmatprep.subr.bf16.mxu0 0
          %2039 = vmatpush1.bf16.msra.mxu0 0
          %2040 = vmatprep.subr.bf16.mxu0 0
          %2041 = vmatpush1.bf16.msra.mxu0 0
          %2042 = vmatprep.subr.bf16.mxu0 0
          %2043 = vmatpush1.bf16.msra.mxu0 0
          %2044 = vmatprep.subr.bf16.mxu0 0
          %2045 = vmatpush1.bf16.msra.mxu0 0
          %2046 = vmatprep.subr.bf16.mxu0 0
          %2047 = vmatpush1.bf16.msra.mxu0 0
          %2048 = vmatprep.subr.bf16.mxu0 0
          %2049 = vmatpush1.bf16.msra.mxu0 0
          %2050 = vmatprep.mubr.bf16.mxu0 0
          %2051 = vmatmul.mubr.bf16.gmra.mrb[0].mxu0 %v1946
          %v2052 = vpop.f32.mrb[0].mxu0
          %v2053 = vadd.f32 %v1968, %v2052
          %v2054 = vpop.f32.mrb[0].mxu0
          %v2055 = vpop.f32.mrb[0].mxu0
          %v2056 = vpop.f32.mrb[0].mxu0
          %2057 = vdwg.mxu0
          %2058 = vst [vmem:[#allocation18] sm:$0xff] %v2053
        $region128: #{tpu_custom_call.1} parent=71 // pred_fallthru
          _
        // Predicated region
        $region129: #{tpu_custom_call.1} parent=71 // pred_check
          %p2059 = pneg %p372
        $region130: #{tpu_custom_call.1} parent=71 // pred_check_branch
          %2061 = sbr.rel (%p2059) target = $region132
        $region131: #{tpu_custom_call.1} parent=71 // pred_region
          %s2063 = ssub.s32 128, 128
          %2064 = vsyncadd [#allocation7], %s2063
          %s2066 = sshll.u32 [#allocation18], 4
          %s2067 = int_to_ptr.vmem [resolvable:$true] %s2066
          %2069 = dma.vmem_to_hbm [thread:$0]  %s2067, 128, %s13, [#allocation7]
        $region132: #{tpu_custom_call.1} parent=71 // pred_fallthru
          _
        // Predicated region
        $region133: #{tpu_custom_call.1} parent=71 // pred_check
          %p2070 = pneg %p372
        $region134: #{tpu_custom_call.1} parent=71 // pred_check_branch
          %2072 = sbr.rel (%p2070) target = $region136
        $region135: #{tpu_custom_call.1} parent=71 // pred_region
          %2073 = dma.done [#allocation7], 128
        $region136: #{tpu_custom_call.1} parent=71 // pred_fallthru
          _
      $region72: #{tpu_custom_call.1} parent=5 // pred_fallthru
        _
      %p2074 = scmp.le.s32.totalorder 2, %s25
      // Predicated region
      $region137: #{tpu_custom_call.1} parent=5 // pred_check
        %p2075 = pneg %p2074
      $region138: #{tpu_custom_call.1} parent=5 // pred_check_branch
        %2077 = sbr.rel (%p2075) target = $region140
      $region139: #{tpu_custom_call.1} parent=5 // pred_region
        %s2078 = ssub.s32 %s25, 2
      $region140: #{tpu_custom_call.1} parent=5 // pred_fallthru
        _
    $region6: #{tpu_custom_call.1} parent=1 // loop_footer
      %s29 = sadd.s32 1, %s25
    $region7: #{tpu_custom_call.1} parent=1 // loop_footer_branch
      %24 = sbr.rel target = $region3
    $region8: #{tpu_custom_call.1} parent=1 // loop_exit
      _
    %2079 = vsyncpa [#allocation6], 1
    %s2080 = scalar_lea.sflag [#allocation6], 1
    %2081 = vsyncpa %s2080, 1
    %2082 = vsyncpa [#allocation9], 1
    %2083 = vsyncpa [#allocation17], 1
    %2084 = vsyncpa [#allocation7], 1
    %s2085 = scalar_lea.sflag [#allocation7], 1
    %2086 = vsyncpa %s2085, 1

</llo_original>
